<compile_context>
chip_gen: v6e
topology: v6e:2x2x1
jax: 0.10.0
libtpu: 0.0.40
codegen_flags: <defaults>
</compile_context>

<pallas_src>
import numpy as np
import jax
import jax.numpy as jnp
from jax import lax
from jax.experimental import pallas as pl
from jax.experimental.pallas import tpu as pltpu

# ----------------------------------------------------------------------------
# Small, forward-consistent hyperparameters
# ----------------------------------------------------------------------------
BATCH = 8          # batch
CHANNELS = 4       # input channels
LENGTH = 64        # time steps of the raw signal
LATENT = 32        # latent_size (encoder output channels)
HIDDEN = 32        # GRU hidden / context size
T_IN = 4           # timesteps_in
T_OUT = 2          # timesteps_out
T_IGNORE = 0       # timesteps_ignore
T_WIN = T_IN + T_IGNORE + T_OUT
NEG_INF = -1e30    # f32-safe mask value (use jnp.finfo(dtype).min if dtype changes)


# ----------------------------------------------------------------------------
# Single fused kernel: encoder -> GRU -> CPC 'same'-mode scoring
# ----------------------------------------------------------------------------
def _cpc_fused_kernel(x_ref, w_enc_ref, b_enc_ref,
                      w_ih_ref, w_hh_ref, b_ih_ref, b_hh_ref,
                      w_pred_ref, b_pred_ref,
                      acc_ref, loss_ref, hidden_ref):
    B, H, D = BATCH, HIDDEN, LATENT

    # -------- encoder: Conv1d(k=1) + ReLU ----------------------------------
    # rows of x_ref are (window_step, batch) flattened; the C=4 contraction is
    # done as 4 broadcast multiply-adds on the VPU (no tiny MXU push).
    x = x_ref[...]                                   # (T_WIN*B, C)
    w_enc = w_enc_ref[...]                           # (C, LATENT)
    acc = x[:, 0:1] * w_enc[0:1, :]
    for c in range(1, CHANNELS):
        acc = acc + x[:, c:c + 1] * w_enc[c:c + 1, :]
    enc = jnp.maximum(acc + b_enc_ref[...], 0.0)     # (T_WIN*B, LATENT)

    # -------- GRU over the first T_IN window steps --------------------------
    # input-gate matmul for all T_IN steps hoisted out of the recurrence.
    gi_all = jnp.dot(enc[0:T_IN * B, :], w_ih_ref[...],
                     preferred_element_type=jnp.float32) + b_ih_ref[...]   # (T_IN*B, 3H)
    w_hh = w_hh_ref[...]                             # hoisted loads / broadcasts
    b_hh = b_hh_ref[...]
    h = jnp.zeros((B, H), jnp.float32)               # init_hidden() -> zeros
    for t in range(T_IN):                            # static unrolled recurrence
        gi = gi_all[t * B:(t + 1) * B, :]
        gh = jnp.dot(h, w_hh, preferred_element_type=jnp.float32) + b_hh
        r = jax.nn.sigmoid(gi[:, 0:H] + gh[:, 0:H])
        z = jax.nn.sigmoid(gi[:, H:2 * H] + gh[:, H:2 * H])
        n = jnp.tanh(gi[:, 2 * H:3 * H] + r * gh[:, 2 * H:3 * H])
        h = (1.0 - z) * n + z * h
    hidden_ref[...] = h                              # == context[-1] == nn.GRU hidden

    # -------- CPC 'same' scoring --------------------------------------------
    # all T_OUT predictor heads in a single (B,H)@(H,T_OUT*LATENT) matmul.
    pred_all = jnp.dot(h, w_pred_ref[...],
                       preferred_element_type=jnp.float32) + b_pred_ref[...]

    row = lax.broadcasted_iota(jnp.int32, (B, B), 0)
    col = lax.broadcasted_iota(jnp.int32, (B, B), 1)
    diag_mask = row == col

    loss_sum = jnp.float32(0.0)
    correct = jnp.float32(0.0)
    for k in range(T_OUT):                           # static unrolled (K = T_OUT)
        pred_k = pred_all[:, k * D:(k + 1) * D]                           # (B, LATENT)
        enc_k = enc[(T_IN + T_IGNORE + k) * B:(T_IN + T_IGNORE + k + 1) * B, :]
        # sim[i, j] = <enc_i, pred_j>  == encoded_latent @ pred_latent.T
        sim = lax.dot_general(enc_k, pred_k, (((1,), (1,)), ((), ())),
                              preferred_element_type=jnp.float32)         # (B, B)
        # log_softmax over dim=-1
        m = jnp.max(sim, axis=-1, keepdims=True)
        lse = m + jnp.log(jnp.sum(jnp.exp(sim - m), axis=-1, keepdims=True))
        lsm = sim - lse
        # loss contribution: sum of the diagonal
        loss_sum = loss_sum + jnp.sum(jnp.where(diag_mask, lsm, 0.0))
        # correct: column-wise argmax == column index  <=>  diag is the column max
        # TODO(synk): torch argmax breaks exact float ties by lowest row index;
        #             this >= test counts any exact tie with the diagonal as correct.
        col_max = jnp.max(lsm, axis=0, keepdims=True)
        diag_v = jnp.max(jnp.where(diag_mask, lsm, NEG_INF), axis=0, keepdims=True)
        correct = correct + jnp.sum((diag_v >= col_max).astype(jnp.float32))

    denom = jnp.float32(B * T_OUT)
    loss_ref[0, 0] = -loss_sum / denom       # loss /= batch * timesteps_out * -1
    acc_ref[0, 0] = correct / denom          # accuracy = correct / (batch * T_out)


# ----------------------------------------------------------------------------
# CPC.forward (train mode, sampling_mode='same', normalize_latents=False)
# ----------------------------------------------------------------------------
def cpc_forward(X, params, t):
    B, L, C = X.shape
    # torch does X.transpose(1,2); Conv1d(k=1); permute(2,0,1)  ==  a per-timestep
    # matmul over channels.  Only the consumed window [t-T_IN, t+T_IGNORE+T_OUT)
    # is encoded; t is a Python int so the slice is static.
    x_win = X[:, t - T_IN:t + T_IGNORE + T_OUT, :]                    # (B, T_WIN, C)
    x_flat = jnp.transpose(x_win, (1, 0, 2)).reshape(T_WIN * B, C)     # rows = (step, batch)

    # fold the T_OUT predictor heads into one weight / bias (host-side, tiny).
    w_pred_flat = jnp.transpose(params["w_pred"], (1, 0, 2)).reshape(HIDDEN, T_OUT * LATENT)
    b_pred_flat = params["b_pred"].reshape(1, T_OUT * LATENT)

    vmem = pl.BlockSpec(memory_space=pltpu.MemorySpace.VMEM)
    smem = pl.BlockSpec(memory_space=pltpu.MemorySpace.SMEM)
    acc, loss, hidden = pl.pallas_call(
        _cpc_fused_kernel,
        out_shape=(jax.ShapeDtypeStruct((1, 1), jnp.float32),
                   jax.ShapeDtypeStruct((1, 1), jnp.float32),
                   jax.ShapeDtypeStruct((B, HIDDEN), jnp.float32)),
        in_specs=[vmem] * 9,
        out_specs=(smem, smem, vmem),
    )(x_flat, params["w_enc"], params["b_enc"],
      params["w_ih"], params["w_hh"], params["b_ih"], params["b_hh"],
      w_pred_flat, b_pred_flat)

    accuracy = acc.reshape(1)
    loss = loss.reshape(1)
    hidden = hidden.reshape(1, B, HIDDEN)   # nn.GRU hidden layout (layers, B, H)
    return accuracy, loss, hidden


# ----------------------------------------------------------------------------
# Deterministic synthetic parameter init
# ----------------------------------------------------------------------------
def init_params(key):
    ks = jax.random.split(key, 8)
    s = 0.1
    return dict(
        # encoder Conv1d weight stored transposed: (C, LATENT)
        w_enc=jax.random.normal(ks[0], (CHANNELS, LATENT), jnp.float32) * s,
        b_enc=jax.random.normal(ks[1], (1, LATENT), jnp.float32) * s,
        # GRU weights stored pre-transposed for x @ W layouts, gate order (r|z|n)
        w_ih=jax.random.normal(ks[2], (LATENT, 3 * HIDDEN), jnp.float32) * s,
        w_hh=jax.random.normal(ks[3], (HIDDEN, 3 * HIDDEN), jnp.float32) * s,
        b_ih=jax.random.normal(ks[4], (1, 3 * HIDDEN), jnp.float32) * s,
        b_hh=jax.random.normal(ks[5], (1, 3 * HIDDEN), jnp.float32) * s,
        # predictor: one Linear(HIDDEN -> LATENT) per future step, pre-transposed
        w_pred=jax.random.normal(ks[6], (T_OUT, HIDDEN, LATENT), jnp.float32) * s,
        b_pred=jax.random.normal(ks[7], (T_OUT, 1, LATENT), jnp.float32) * s,
    )


if __name__ == "__main__":
    key = jax.random.PRNGKey(0)
    kx, kp = jax.random.split(key)
    X = jax.random.normal(kx, (BATCH, LENGTH, CHANNELS), jnp.float32)
    params = init_params(kp)

    # torch: t = np.random.randint(T_IN, steps - T_OUT - T_IGNORE)
    # TODO(synk): host-side RNG draw kept, made deterministic with a fixed seed.
    rng = np.random.default_rng(0)
    t = int(rng.integers(T_IN, LENGTH - T_OUT - T_IGNORE))

    accuracy, loss, hidden = cpc_forward(X, params, t)
    jax.block_until_ready((accuracy, loss, hidden))
    print("KERNEL_OK")
</pallas_src>

<mosaic_0001>
module attributes {stable_mosaic.version = 11 : i64} {
  func.func @_cpc_fused_kernel(%arg0: memref<48x4xf32, #tpu.memory_space<vmem>>, %arg1: memref<4x32xf32, #tpu.memory_space<vmem>>, %arg2: memref<1x32xf32, #tpu.memory_space<vmem>>, %arg3: memref<32x96xf32, #tpu.memory_space<vmem>>, %arg4: memref<32x96xf32, #tpu.memory_space<vmem>>, %arg5: memref<1x96xf32, #tpu.memory_space<vmem>>, %arg6: memref<1x96xf32, #tpu.memory_space<vmem>>, %arg7: memref<32x64xf32, #tpu.memory_space<vmem>>, %arg8: memref<1x64xf32, #tpu.memory_space<vmem>>, %arg9: memref<1x1xf32, #tpu.memory_space<smem>>, %arg10: memref<1x1xf32, #tpu.memory_space<smem>>, %arg11: memref<8x32xf32, #tpu.memory_space<vmem>>) attributes {dimension_semantics = [], scalar_prefetch = 0 : i64, scratch_operands = 0 : i64, tpu.core_type = #tpu.core_type<tc>} {
    %c0 = arith.constant 0 : index
    %c0_0 = arith.constant 0 : index
    %0 = vector.load %arg0[%c0, %c0_0] : memref<48x4xf32, #tpu.memory_space<vmem>>, vector<48x4xf32>
    %c0_1 = arith.constant 0 : index
    %c0_2 = arith.constant 0 : index
    %1 = vector.load %arg1[%c0_1, %c0_2] : memref<4x32xf32, #tpu.memory_space<vmem>>, vector<4x32xf32>
    %2 = vector.extract_strided_slice %0 {offsets = [0, 0], sizes = [48, 1], strides = [1, 1]} : vector<48x4xf32> to vector<48x1xf32>
    %3 = vector.extract_strided_slice %1 {offsets = [0, 0], sizes = [1, 32], strides = [1, 1]} : vector<4x32xf32> to vector<1x32xf32>
    %4 = vector.broadcast %2 : vector<48x1xf32> to vector<48x32xf32>
    %5 = vector.broadcast %3 : vector<1x32xf32> to vector<48x32xf32>
    %6 = arith.mulf %4, %5 : vector<48x32xf32>
    %7 = vector.extract_strided_slice %0 {offsets = [0, 1], sizes = [48, 1], strides = [1, 1]} : vector<48x4xf32> to vector<48x1xf32>
    %8 = vector.extract_strided_slice %1 {offsets = [1, 0], sizes = [1, 32], strides = [1, 1]} : vector<4x32xf32> to vector<1x32xf32>
    %9 = vector.broadcast %7 : vector<48x1xf32> to vector<48x32xf32>
    %10 = vector.broadcast %8 : vector<1x32xf32> to vector<48x32xf32>
    %11 = arith.mulf %9, %10 : vector<48x32xf32>
    %12 = arith.addf %6, %11 : vector<48x32xf32>
    %13 = vector.extract_strided_slice %0 {offsets = [0, 2], sizes = [48, 1], strides = [1, 1]} : vector<48x4xf32> to vector<48x1xf32>
    %14 = vector.extract_strided_slice %1 {offsets = [2, 0], sizes = [1, 32], strides = [1, 1]} : vector<4x32xf32> to vector<1x32xf32>
    %15 = vector.broadcast %13 : vector<48x1xf32> to vector<48x32xf32>
    %16 = vector.broadcast %14 : vector<1x32xf32> to vector<48x32xf32>
    %17 = arith.mulf %15, %16 : vector<48x32xf32>
    %18 = arith.addf %12, %17 : vector<48x32xf32>
    %19 = vector.extract_strided_slice %0 {offsets = [0, 3], sizes = [48, 1], strides = [1, 1]} : vector<48x4xf32> to vector<48x1xf32>
    %20 = vector.extract_strided_slice %1 {offsets = [3, 0], sizes = [1, 32], strides = [1, 1]} : vector<4x32xf32> to vector<1x32xf32>
    %21 = vector.broadcast %19 : vector<48x1xf32> to vector<48x32xf32>
    %22 = vector.broadcast %20 : vector<1x32xf32> to vector<48x32xf32>
    %23 = arith.mulf %21, %22 : vector<48x32xf32>
    %24 = arith.addf %18, %23 : vector<48x32xf32>
    %c0_3 = arith.constant 0 : index
    %c0_4 = arith.constant 0 : index
    %25 = vector.load %arg2[%c0_3, %c0_4] : memref<1x32xf32, #tpu.memory_space<vmem>>, vector<1x32xf32>
    %26 = vector.broadcast %25 : vector<1x32xf32> to vector<48x32xf32>
    %27 = arith.addf %24, %26 : vector<48x32xf32>
    %cst = arith.constant 0.000000e+00 : f32
    %28 = vector.broadcast %cst : f32 to vector<48x32xf32>
    %29 = arith.maximumf %27, %28 : vector<48x32xf32>
    %30 = vector.extract_strided_slice %29 {offsets = [0, 0], sizes = [32, 32], strides = [1, 1]} : vector<48x32xf32> to vector<32x32xf32>
    %c0_5 = arith.constant 0 : index
    %c0_6 = arith.constant 0 : index
    %31 = vector.load %arg3[%c0_5, %c0_6] : memref<32x96xf32, #tpu.memory_space<vmem>>, vector<32x96xf32>
    %cst_7 = arith.constant dense<0.000000e+00> : vector<32x96xf32>
    %32 = tpu.matmul %30, %31, %cst_7 {dimension_numbers = #tpu.dot_dimension_numbers<[1], [0], [0], [1], [0, 0, 1, 1], [], []>} : vector<32x32xf32>, vector<32x96xf32>, vector<32x96xf32> -> vector<32x96xf32>
    %c0_8 = arith.constant 0 : index
    %c0_9 = arith.constant 0 : index
    %33 = vector.load %arg5[%c0_8, %c0_9] : memref<1x96xf32, #tpu.memory_space<vmem>>, vector<1x96xf32>
    %34 = vector.broadcast %33 : vector<1x96xf32> to vector<32x96xf32>
    %35 = arith.addf %32, %34 : vector<32x96xf32>
    %c0_10 = arith.constant 0 : index
    %c0_11 = arith.constant 0 : index
    %36 = vector.load %arg4[%c0_10, %c0_11] : memref<32x96xf32, #tpu.memory_space<vmem>>, vector<32x96xf32>
    %c0_12 = arith.constant 0 : index
    %c0_13 = arith.constant 0 : index
    %37 = vector.load %arg6[%c0_12, %c0_13] : memref<1x96xf32, #tpu.memory_space<vmem>>, vector<1x96xf32>
    %cst_14 = arith.constant 0.000000e+00 : f32
    %38 = vector.broadcast %cst_14 : f32 to vector<8x32xf32>
    %39 = vector.extract_strided_slice %35 {offsets = [0, 0], sizes = [8, 96], strides = [1, 1]} : vector<32x96xf32> to vector<8x96xf32>
    %cst_15 = arith.constant dense<0.000000e+00> : vector<8x96xf32>
    %40 = tpu.matmul %38, %36, %cst_15 {dimension_numbers = #tpu.dot_dimension_numbers<[1], [0], [0], [1], [0, 0, 1, 1], [], []>} : vector<8x32xf32>, vector<32x96xf32>, vector<8x96xf32> -> vector<8x96xf32>
    %41 = vector.broadcast %37 : vector<1x96xf32> to vector<8x96xf32>
    %42 = arith.addf %40, %41 : vector<8x96xf32>
    %43 = vector.extract_strided_slice %39 {offsets = [0, 0], sizes = [8, 32], strides = [1, 1]} : vector<8x96xf32> to vector<8x32xf32>
    %44 = vector.extract_strided_slice %42 {offsets = [0, 0], sizes = [8, 32], strides = [1, 1]} : vector<8x96xf32> to vector<8x32xf32>
    %45 = arith.addf %43, %44 : vector<8x32xf32>
    %46 = arith.negf %45 : vector<8x32xf32>
    %47 = math.exp %46 : vector<8x32xf32>
    %cst_16 = arith.constant 1.000000e+00 : f32
    %48 = vector.broadcast %cst_16 : f32 to vector<8x32xf32>
    %49 = arith.addf %48, %47 : vector<8x32xf32>
    %50 = arith.divf %48, %49 : vector<8x32xf32>
    %51 = vector.extract_strided_slice %39 {offsets = [0, 32], sizes = [8, 32], strides = [1, 1]} : vector<8x96xf32> to vector<8x32xf32>
    %52 = vector.extract_strided_slice %42 {offsets = [0, 32], sizes = [8, 32], strides = [1, 1]} : vector<8x96xf32> to vector<8x32xf32>
    %53 = arith.addf %51, %52 : vector<8x32xf32>
    %54 = arith.negf %53 : vector<8x32xf32>
    %55 = math.exp %54 : vector<8x32xf32>
    %cst_17 = arith.constant 1.000000e+00 : f32
    %56 = vector.broadcast %cst_17 : f32 to vector<8x32xf32>
    %57 = arith.addf %56, %55 : vector<8x32xf32>
    %58 = arith.divf %56, %57 : vector<8x32xf32>
    %59 = vector.extract_strided_slice %39 {offsets = [0, 64], sizes = [8, 32], strides = [1, 1]} : vector<8x96xf32> to vector<8x32xf32>
    %60 = vector.extract_strided_slice %42 {offsets = [0, 64], sizes = [8, 32], strides = [1, 1]} : vector<8x96xf32> to vector<8x32xf32>
    %61 = arith.mulf %50, %60 : vector<8x32xf32>
    %62 = arith.addf %59, %61 : vector<8x32xf32>
    %63 = math.tanh %62 : vector<8x32xf32>
    %cst_18 = arith.constant 1.000000e+00 : f32
    %64 = vector.broadcast %cst_18 : f32 to vector<8x32xf32>
    %65 = arith.subf %64, %58 : vector<8x32xf32>
    %66 = arith.mulf %65, %63 : vector<8x32xf32>
    %67 = arith.mulf %58, %38 : vector<8x32xf32>
    %68 = arith.addf %66, %67 : vector<8x32xf32>
    %69 = vector.extract_strided_slice %35 {offsets = [8, 0], sizes = [8, 96], strides = [1, 1]} : vector<32x96xf32> to vector<8x96xf32>
    %cst_19 = arith.constant dense<0.000000e+00> : vector<8x96xf32>
    %70 = tpu.matmul %68, %36, %cst_19 {dimension_numbers = #tpu.dot_dimension_numbers<[1], [0], [0], [1], [0, 0, 1, 1], [], []>} : vector<8x32xf32>, vector<32x96xf32>, vector<8x96xf32> -> vector<8x96xf32>
    %71 = vector.broadcast %37 : vector<1x96xf32> to vector<8x96xf32>
    %72 = arith.addf %70, %71 : vector<8x96xf32>
    %73 = vector.extract_strided_slice %69 {offsets = [0, 0], sizes = [8, 32], strides = [1, 1]} : vector<8x96xf32> to vector<8x32xf32>
    %74 = vector.extract_strided_slice %72 {offsets = [0, 0], sizes = [8, 32], strides = [1, 1]} : vector<8x96xf32> to vector<8x32xf32>
    %75 = arith.addf %73, %74 : vector<8x32xf32>
    %76 = arith.negf %75 : vector<8x32xf32>
    %77 = math.exp %76 : vector<8x32xf32>
    %cst_20 = arith.constant 1.000000e+00 : f32
    %78 = vector.broadcast %cst_20 : f32 to vector<8x32xf32>
    %79 = arith.addf %78, %77 : vector<8x32xf32>
    %80 = arith.divf %78, %79 : vector<8x32xf32>
    %81 = vector.extract_strided_slice %69 {offsets = [0, 32], sizes = [8, 32], strides = [1, 1]} : vector<8x96xf32> to vector<8x32xf32>
    %82 = vector.extract_strided_slice %72 {offsets = [0, 32], sizes = [8, 32], strides = [1, 1]} : vector<8x96xf32> to vector<8x32xf32>
    %83 = arith.addf %81, %82 : vector<8x32xf32>
    %84 = arith.negf %83 : vector<8x32xf32>
    %85 = math.exp %84 : vector<8x32xf32>
    %cst_21 = arith.constant 1.000000e+00 : f32
    %86 = vector.broadcast %cst_21 : f32 to vector<8x32xf32>
    %87 = arith.addf %86, %85 : vector<8x32xf32>
    %88 = arith.divf %86, %87 : vector<8x32xf32>
    %89 = vector.extract_strided_slice %69 {offsets = [0, 64], sizes = [8, 32], strides = [1, 1]} : vector<8x96xf32> to vector<8x32xf32>
    %90 = vector.extract_strided_slice %72 {offsets = [0, 64], sizes = [8, 32], strides = [1, 1]} : vector<8x96xf32> to vector<8x32xf32>
    %91 = arith.mulf %80, %90 : vector<8x32xf32>
    %92 = arith.addf %89, %91 : vector<8x32xf32>
    %93 = math.tanh %92 : vector<8x32xf32>
    %cst_22 = arith.constant 1.000000e+00 : f32
    %94 = vector.broadcast %cst_22 : f32 to vector<8x32xf32>
    %95 = arith.subf %94, %88 : vector<8x32xf32>
    %96 = arith.mulf %95, %93 : vector<8x32xf32>
    %97 = arith.mulf %88, %68 : vector<8x32xf32>
    %98 = arith.addf %96, %97 : vector<8x32xf32>
    %99 = vector.extract_strided_slice %35 {offsets = [16, 0], sizes = [8, 96], strides = [1, 1]} : vector<32x96xf32> to vector<8x96xf32>
    %cst_23 = arith.constant dense<0.000000e+00> : vector<8x96xf32>
    %100 = tpu.matmul %98, %36, %cst_23 {dimension_numbers = #tpu.dot_dimension_numbers<[1], [0], [0], [1], [0, 0, 1, 1], [], []>} : vector<8x32xf32>, vector<32x96xf32>, vector<8x96xf32> -> vector<8x96xf32>
    %101 = vector.broadcast %37 : vector<1x96xf32> to vector<8x96xf32>
    %102 = arith.addf %100, %101 : vector<8x96xf32>
    %103 = vector.extract_strided_slice %99 {offsets = [0, 0], sizes = [8, 32], strides = [1, 1]} : vector<8x96xf32> to vector<8x32xf32>
    %104 = vector.extract_strided_slice %102 {offsets = [0, 0], sizes = [8, 32], strides = [1, 1]} : vector<8x96xf32> to vector<8x32xf32>
    %105 = arith.addf %103, %104 : vector<8x32xf32>
    %106 = arith.negf %105 : vector<8x32xf32>
    %107 = math.exp %106 : vector<8x32xf32>
    %cst_24 = arith.constant 1.000000e+00 : f32
    %108 = vector.broadcast %cst_24 : f32 to vector<8x32xf32>
    %109 = arith.addf %108, %107 : vector<8x32xf32>
    %110 = arith.divf %108, %109 : vector<8x32xf32>
    %111 = vector.extract_strided_slice %99 {offsets = [0, 32], sizes = [8, 32], strides = [1, 1]} : vector<8x96xf32> to vector<8x32xf32>
    %112 = vector.extract_strided_slice %102 {offsets = [0, 32], sizes = [8, 32], strides = [1, 1]} : vector<8x96xf32> to vector<8x32xf32>
    %113 = arith.addf %111, %112 : vector<8x32xf32>
    %114 = arith.negf %113 : vector<8x32xf32>
    %115 = math.exp %114 : vector<8x32xf32>
    %cst_25 = arith.constant 1.000000e+00 : f32
    %116 = vector.broadcast %cst_25 : f32 to vector<8x32xf32>
    %117 = arith.addf %116, %115 : vector<8x32xf32>
    %118 = arith.divf %116, %117 : vector<8x32xf32>
    %119 = vector.extract_strided_slice %99 {offsets = [0, 64], sizes = [8, 32], strides = [1, 1]} : vector<8x96xf32> to vector<8x32xf32>
    %120 = vector.extract_strided_slice %102 {offsets = [0, 64], sizes = [8, 32], strides = [1, 1]} : vector<8x96xf32> to vector<8x32xf32>
    %121 = arith.mulf %110, %120 : vector<8x32xf32>
    %122 = arith.addf %119, %121 : vector<8x32xf32>
    %123 = math.tanh %122 : vector<8x32xf32>
    %cst_26 = arith.constant 1.000000e+00 : f32
    %124 = vector.broadcast %cst_26 : f32 to vector<8x32xf32>
    %125 = arith.subf %124, %118 : vector<8x32xf32>
    %126 = arith.mulf %125, %123 : vector<8x32xf32>
    %127 = arith.mulf %118, %98 : vector<8x32xf32>
    %128 = arith.addf %126, %127 : vector<8x32xf32>
    %129 = vector.extract_strided_slice %35 {offsets = [24, 0], sizes = [8, 96], strides = [1, 1]} : vector<32x96xf32> to vector<8x96xf32>
    %cst_27 = arith.constant dense<0.000000e+00> : vector<8x96xf32>
    %130 = tpu.matmul %128, %36, %cst_27 {dimension_numbers = #tpu.dot_dimension_numbers<[1], [0], [0], [1], [0, 0, 1, 1], [], []>} : vector<8x32xf32>, vector<32x96xf32>, vector<8x96xf32> -> vector<8x96xf32>
    %131 = vector.broadcast %37 : vector<1x96xf32> to vector<8x96xf32>
    %132 = arith.addf %130, %131 : vector<8x96xf32>
    %133 = vector.extract_strided_slice %129 {offsets = [0, 0], sizes = [8, 32], strides = [1, 1]} : vector<8x96xf32> to vector<8x32xf32>
    %134 = vector.extract_strided_slice %132 {offsets = [0, 0], sizes = [8, 32], strides = [1, 1]} : vector<8x96xf32> to vector<8x32xf32>
    %135 = arith.addf %133, %134 : vector<8x32xf32>
    %136 = arith.negf %135 : vector<8x32xf32>
    %137 = math.exp %136 : vector<8x32xf32>
    %cst_28 = arith.constant 1.000000e+00 : f32
    %138 = vector.broadcast %cst_28 : f32 to vector<8x32xf32>
    %139 = arith.addf %138, %137 : vector<8x32xf32>
    %140 = arith.divf %138, %139 : vector<8x32xf32>
    %141 = vector.extract_strided_slice %129 {offsets = [0, 32], sizes = [8, 32], strides = [1, 1]} : vector<8x96xf32> to vector<8x32xf32>
    %142 = vector.extract_strided_slice %132 {offsets = [0, 32], sizes = [8, 32], strides = [1, 1]} : vector<8x96xf32> to vector<8x32xf32>
    %143 = arith.addf %141, %142 : vector<8x32xf32>
    %144 = arith.negf %143 : vector<8x32xf32>
    %145 = math.exp %144 : vector<8x32xf32>
    %cst_29 = arith.constant 1.000000e+00 : f32
    %146 = vector.broadcast %cst_29 : f32 to vector<8x32xf32>
    %147 = arith.addf %146, %145 : vector<8x32xf32>
    %148 = arith.divf %146, %147 : vector<8x32xf32>
    %149 = vector.extract_strided_slice %129 {offsets = [0, 64], sizes = [8, 32], strides = [1, 1]} : vector<8x96xf32> to vector<8x32xf32>
    %150 = vector.extract_strided_slice %132 {offsets = [0, 64], sizes = [8, 32], strides = [1, 1]} : vector<8x96xf32> to vector<8x32xf32>
    %151 = arith.mulf %140, %150 : vector<8x32xf32>
    %152 = arith.addf %149, %151 : vector<8x32xf32>
    %153 = math.tanh %152 : vector<8x32xf32>
    %cst_30 = arith.constant 1.000000e+00 : f32
    %154 = vector.broadcast %cst_30 : f32 to vector<8x32xf32>
    %155 = arith.subf %154, %148 : vector<8x32xf32>
    %156 = arith.mulf %155, %153 : vector<8x32xf32>
    %157 = arith.mulf %148, %128 : vector<8x32xf32>
    %158 = arith.addf %156, %157 : vector<8x32xf32>
    %c0_31 = arith.constant 0 : index
    %c0_32 = arith.constant 0 : index
    %159 = vector.load %arg11[%c0_31, %c0_32] : memref<8x32xf32, #tpu.memory_space<vmem>>, vector<8x32xf32>
    tpu.vector_store %arg11[%c0_31, %c0_32], %158 {strides = array<i32>} : memref<8x32xf32, #tpu.memory_space<vmem>>, vector<8x32xf32>,
    %c0_33 = arith.constant 0 : index
    %c0_34 = arith.constant 0 : index
    %160 = vector.load %arg7[%c0_33, %c0_34] : memref<32x64xf32, #tpu.memory_space<vmem>>, vector<32x64xf32>
    %cst_35 = arith.constant dense<0.000000e+00> : vector<8x64xf32>
    %161 = tpu.matmul %158, %160, %cst_35 {dimension_numbers = #tpu.dot_dimension_numbers<[1], [0], [0], [1], [0, 0, 1, 1], [], []>} : vector<8x32xf32>, vector<32x64xf32>, vector<8x64xf32> -> vector<8x64xf32>
    %c0_36 = arith.constant 0 : index
    %c0_37 = arith.constant 0 : index
    %162 = vector.load %arg8[%c0_36, %c0_37] : memref<1x64xf32, #tpu.memory_space<vmem>>, vector<1x64xf32>
    %163 = vector.broadcast %162 : vector<1x64xf32> to vector<8x64xf32>
    %164 = arith.addf %161, %163 : vector<8x64xf32>
    %165 = tpu.iota {dimensions = array<i32: 0>} : vector<8x8xi32>
    %166 = tpu.iota {dimensions = array<i32: 1>} : vector<8x8xi32>
    %167 = arith.cmpi eq, %165, %166 : vector<8x8xi32>
    %168 = vector.extract_strided_slice %164 {offsets = [0, 0], sizes = [8, 32], strides = [1, 1]} : vector<8x64xf32> to vector<8x32xf32>
    %169 = vector.extract_strided_slice %29 {offsets = [32, 0], sizes = [8, 32], strides = [1, 1]} : vector<48x32xf32> to vector<8x32xf32>
    %cst_38 = arith.constant dense<0.000000e+00> : vector<8x8xf32>
    %170 = tpu.matmul %169, %168, %cst_38 {dimension_numbers = #tpu.dot_dimension_numbers<[1], [1], [0], [0], [0, 0, 1, 0], [], []>} : vector<8x32xf32>, vector<8x32xf32>, vector<8x8xf32> -> vector<8x8xf32>
    %cst_39 = arith.constant dense<0xFF800000> : vector<8xf32>
    %171 = vector.multi_reduction <maximumf>, %170, %cst_39 [1] : vector<8x8xf32> to vector<8xf32>
    %172 = vector.shape_cast %171 : vector<8xf32> to vector<8x1xf32>
    %173 = vector.broadcast %172 : vector<8x1xf32> to vector<8x8xf32>
    %174 = arith.subf %170, %173 : vector<8x8xf32>
    %175 = math.exp %174 : vector<8x8xf32>
    %cst_40 = arith.constant dense<0.000000e+00> : vector<8xf32>
    %176 = vector.multi_reduction <add>, %175, %cst_40 [1] : vector<8x8xf32> to vector<8xf32>
    %177 = vector.shape_cast %176 : vector<8xf32> to vector<8x1xf32>
    %178 = math.log %177 : vector<8x1xf32>
    %179 = arith.addf %172, %178 : vector<8x1xf32>
    %180 = vector.broadcast %179 : vector<8x1xf32> to vector<8x8xf32>
    %181 = arith.subf %170, %180 : vector<8x8xf32>
    %cst_41 = arith.constant 0.000000e+00 : f32
    %182 = vector.broadcast %cst_41 : f32 to vector<8x8xf32>
    %183 = arith.select %167, %181, %182 : vector<8x8xi1>, vector<8x8xf32>
    %184 = vector.shape_cast %183 : vector<8x8xf32> to vector<1x8x8xf32>
    %cst_42 = arith.constant dense<0.000000e+00> : vector<1xf32>
    %185 = vector.multi_reduction <add>, %184, %cst_42 [1, 2] : vector<1x8x8xf32> to vector<1xf32>
    %186 = vector.shape_cast %185 : vector<1xf32> to vector<1x1x1xf32>
    %187 = vector.extract %186[0, 0, 0] : f32 from vector<1x1x1xf32>
    %cst_43 = arith.constant 0.000000e+00 : f32
    %188 = arith.addf %cst_43, %187 : f32
    %cst_44 = arith.constant dense<0xFF800000> : vector<8xf32>
    %189 = vector.multi_reduction <maximumf>, %181, %cst_44 [0] : vector<8x8xf32> to vector<8xf32>
    %190 = vector.shape_cast %189 : vector<8xf32> to vector<1x8xf32>
    %cst_45 = arith.constant -1.000000e+30 : f32
    %191 = vector.broadcast %cst_45 : f32 to vector<8x8xf32>
    %192 = arith.select %167, %181, %191 : vector<8x8xi1>, vector<8x8xf32>
    %cst_46 = arith.constant dense<0xFF800000> : vector<8xf32>
    %193 = vector.multi_reduction <maximumf>, %192, %cst_46 [0] : vector<8x8xf32> to vector<8xf32>
    %194 = vector.shape_cast %193 : vector<8xf32> to vector<1x8xf32>
    %195 = arith.cmpf oge, %194, %190 : vector<1x8xf32>
    %196 = arith.extui %195 : vector<1x8xi1> to vector<1x8xi32>
    %197 = arith.sitofp %196 : vector<1x8xi32> to vector<1x8xf32>
    %198 = vector.shape_cast %197 : vector<1x8xf32> to vector<1x1x8xf32>
    %cst_47 = arith.constant dense<0.000000e+00> : vector<1xf32>
    %199 = vector.multi_reduction <add>, %198, %cst_47 [1, 2] : vector<1x1x8xf32> to vector<1xf32>
    %200 = vector.shape_cast %199 : vector<1xf32> to vector<1x1x1xf32>
    %201 = vector.extract %200[0, 0, 0] : f32 from vector<1x1x1xf32>
    %cst_48 = arith.constant 0.000000e+00 : f32
    %202 = arith.addf %cst_48, %201 : f32
    %203 = vector.extract_strided_slice %164 {offsets = [0, 32], sizes = [8, 32], strides = [1, 1]} : vector<8x64xf32> to vector<8x32xf32>
    %204 = vector.extract_strided_slice %29 {offsets = [40, 0], sizes = [8, 32], strides = [1, 1]} : vector<48x32xf32> to vector<8x32xf32>
    %cst_49 = arith.constant dense<0.000000e+00> : vector<8x8xf32>
    %205 = tpu.matmul %204, %203, %cst_49 {dimension_numbers = #tpu.dot_dimension_numbers<[1], [1], [0], [0], [0, 0, 1, 0], [], []>} : vector<8x32xf32>, vector<8x32xf32>, vector<8x8xf32> -> vector<8x8xf32>
    %cst_50 = arith.constant dense<0xFF800000> : vector<8xf32>
    %206 = vector.multi_reduction <maximumf>, %205, %cst_50 [1] : vector<8x8xf32> to vector<8xf32>
    %207 = vector.shape_cast %206 : vector<8xf32> to vector<8x1xf32>
    %208 = vector.broadcast %207 : vector<8x1xf32> to vector<8x8xf32>
    %209 = arith.subf %205, %208 : vector<8x8xf32>
    %210 = math.exp %209 : vector<8x8xf32>
    %cst_51 = arith.constant dense<0.000000e+00> : vector<8xf32>
    %211 = vector.multi_reduction <add>, %210, %cst_51 [1] : vector<8x8xf32> to vector<8xf32>
    %212 = vector.shape_cast %211 : vector<8xf32> to vector<8x1xf32>
    %213 = math.log %212 : vector<8x1xf32>
    %214 = arith.addf %207, %213 : vector<8x1xf32>
    %215 = vector.broadcast %214 : vector<8x1xf32> to vector<8x8xf32>
    %216 = arith.subf %205, %215 : vector<8x8xf32>
    %cst_52 = arith.constant 0.000000e+00 : f32
    %217 = vector.broadcast %cst_52 : f32 to vector<8x8xf32>
    %218 = arith.select %167, %216, %217 : vector<8x8xi1>, vector<8x8xf32>
    %219 = vector.shape_cast %218 : vector<8x8xf32> to vector<1x8x8xf32>
    %cst_53 = arith.constant dense<0.000000e+00> : vector<1xf32>
    %220 = vector.multi_reduction <add>, %219, %cst_53 [1, 2] : vector<1x8x8xf32> to vector<1xf32>
    %221 = vector.shape_cast %220 : vector<1xf32> to vector<1x1x1xf32>
    %222 = vector.extract %221[0, 0, 0] : f32 from vector<1x1x1xf32>
    %223 = arith.addf %188, %222 : f32
    %cst_54 = arith.constant dense<0xFF800000> : vector<8xf32>
    %224 = vector.multi_reduction <maximumf>, %216, %cst_54 [0] : vector<8x8xf32> to vector<8xf32>
    %225 = vector.shape_cast %224 : vector<8xf32> to vector<1x8xf32>
    %cst_55 = arith.constant -1.000000e+30 : f32
    %226 = vector.broadcast %cst_55 : f32 to vector<8x8xf32>
    %227 = arith.select %167, %216, %226 : vector<8x8xi1>, vector<8x8xf32>
    %cst_56 = arith.constant dense<0xFF800000> : vector<8xf32>
    %228 = vector.multi_reduction <maximumf>, %227, %cst_56 [0] : vector<8x8xf32> to vector<8xf32>
    %229 = vector.shape_cast %228 : vector<8xf32> to vector<1x8xf32>
    %230 = arith.cmpf oge, %229, %225 : vector<1x8xf32>
    %231 = arith.extui %230 : vector<1x8xi1> to vector<1x8xi32>
    %232 = arith.sitofp %231 : vector<1x8xi32> to vector<1x8xf32>
    %233 = vector.shape_cast %232 : vector<1x8xf32> to vector<1x1x8xf32>
    %cst_57 = arith.constant dense<0.000000e+00> : vector<1xf32>
    %234 = vector.multi_reduction <add>, %233, %cst_57 [1, 2] : vector<1x1x8xf32> to vector<1xf32>
    %235 = vector.shape_cast %234 : vector<1xf32> to vector<1x1x1xf32>
    %236 = vector.extract %235[0, 0, 0] : f32 from vector<1x1x1xf32>
    %237 = arith.addf %202, %236 : f32
    %cst_58 = arith.constant 0.000000e+00 : f32
    %238 = arith.subf %cst_58, %223 : f32
    %cst_59 = arith.constant 1.600000e+01 : f32
    %239 = arith.divf %238, %cst_59 : f32
    %c0_60 = arith.constant 0 : index
    %c0_61 = arith.constant 0 : index
    %240 = memref.load %arg10[%c0_60, %c0_61] : memref<1x1xf32, #tpu.memory_space<smem>>
    memref.store %239, %arg10[%c0_60, %c0_61] : memref<1x1xf32, #tpu.memory_space<smem>>
    %cst_62 = arith.constant 1.600000e+01 : f32
    %241 = arith.divf %237, %cst_62 : f32
    %c0_63 = arith.constant 0 : index
    %c0_64 = arith.constant 0 : index
    %242 = memref.load %arg9[%c0_63, %c0_64] : memref<1x1xf32, #tpu.memory_space<smem>>
    memref.store %241, %arg9[%c0_63, %c0_64] : memref<1x1xf32, #tpu.memory_space<smem>>
    return
  }
}

</mosaic_0001>

<llo_original>
// kernel: tpu_custom_call.1
$region0: #{tpu_custom_call.1}
  #allocation0 [shape = 'u32[]', space=smem, size = 0x4, offset = 0x4, fixed_abs, tag = 'smem constant byte address 0x4 - core index']
  #allocation1 [shape = 'u32[144,128]{1,0:T(1,128)}', space=vmem, size = 0x12000, scoped, tag = 'internal scratch']
  %s0 = inlined_call_operand.vmem [shape: f32[48,4], index: 0, kind: input, shape index: {}]
  %s1 = inlined_call_operand.hbm [shape: f32[4,32], index: 1, kind: input, shape index: {}]
  %s2 = inlined_call_operand.hbm [shape: f32[1,32], index: 2, kind: input, shape index: {}]
  %s3 = inlined_call_operand.vmem [shape: f32[32,96], index: 3, kind: input, shape index: {}]
  %s4 = inlined_call_operand.hbm [shape: f32[32,96], index: 4, kind: input, shape index: {}]
  %s5 = inlined_call_operand.hbm [shape: f32[1,96], index: 5, kind: input, shape index: {}]
  %s6 = inlined_call_operand.hbm [shape: f32[1,96], index: 6, kind: input, shape index: {}]
  %s7 = inlined_call_operand.vmem [shape: f32[32,64], index: 7, kind: input, shape index: {}]
  %s8 = inlined_call_operand.vmem [shape: f32[1,64], index: 8, kind: input, shape index: {}]
  %s9 = inlined_call_operand.hbm [shape: f32[1,1], index: 9, kind: output, shape index: {0}]
  %s10 = inlined_call_operand.hbm [shape: f32[1,1], index: 10, kind: output, shape index: {1}]
  %s11 = inlined_call_operand.hbm [shape: f32[8,32], index: 11, kind: output, shape index: {2}]
  %12 = xla_tuple %s9, %s10, %s11
  %s13 = sld [smem:[#allocation0]]
  $region82: #{tpu_custom_call.1} parent=0
    _
  %s15 = ssub.s32 1, %s13
  %s16 = scalar_select 0, %s15, %s13
  $region1: #{tpu_custom_call.1} parent=0
    #allocation2 [shape = 'u8[2048]{0}', space=vmem, size = 0x800, scoped, tag = 'input window, operand 1, single buffered']
    #allocation3 [shape = 's32[1]{0}', space=sflag, size = 0x4, scoped, tag = 'scoped memory for tpu_custom_call.1']
    #allocation4 [shape = 's32[1]{0}', space=sflag, size = 0x4, scoped, tag = 'scoped memory for tpu_custom_call.1']
    #allocation5 [shape = 's32[1]{0}', space=sflag, size = 0x4, scoped, tag = 'scoped memory for tpu_custom_call.1']
    #allocation6 [shape = 'u8[512]{0}', space=vmem, size = 0x400, scoped, tag = 'input window, operand 2, single buffered']
    #allocation7 [shape = 's32[1]{0}', space=sflag, size = 0x4, scoped, tag = 'scoped memory for tpu_custom_call.1']
    #allocation8 [shape = 'u8[16384]{0}', space=vmem, size = 0x4000, scoped, tag = 'input window, operand 4, single buffered']
    #allocation9 [shape = 'u8[512]{0}', space=vmem, size = 0x400, scoped, tag = 'input window, operand 5, single buffered']
    #allocation10 [shape = 's32[1]{0}', space=sflag, size = 0x4, scoped, tag = 'scoped memory for tpu_custom_call.1']
    #allocation11 [shape = 'u8[512]{0}', space=vmem, size = 0x400, scoped, tag = 'input window, operand 6, single buffered']
    #allocation12 [shape = 'u8[512]{0}', space=smem, size = 0x200, scoped, tag = 'output window, operand 0, single buffered']
    #allocation13 [shape = 'u8[512]{0}', space=smem, size = 0x200, scoped, tag = 'output window, operand 1, single buffered']
    #allocation14 [shape = 's32[1]{0}', space=sflag, size = 0x4, scoped, tag = 'scoped memory for tpu_custom_call.1']
    #allocation15 [shape = 'u8[4096]{0}', space=vmem, size = 0x1000, scoped, tag = 'output window, operand 2, single buffered']
    %17 = vsyncpa [#allocation3], 0
    %18 = vsyncpa [#allocation7], 0
    %19 = vsyncpa [#allocation10], 0
    %20 = vsyncpa [#allocation5], 0
    %21 = vsyncpa [#allocation14], 0
    %22 = vsyncpa [#allocation4], 0
    // Predicated region
    $region2: #{tpu_custom_call.1} parent=1 // pred_check
      _
    $region3: #{tpu_custom_call.1} parent=1 // pred_check_branch
      %24 = sbr.rel (0) target = $region5
    $region4: #{tpu_custom_call.1} parent=1 // pred_region
      _
    $region5: #{tpu_custom_call.1} parent=1 // pred_fallthru
      _
    // Predicated region
    $region6: #{tpu_custom_call.1} parent=1 // pred_check
      _
    $region7: #{tpu_custom_call.1} parent=1 // pred_check_branch
      %26 = sbr.rel (0) target = $region9
    $region8: #{tpu_custom_call.1} parent=1 // pred_region
      %s28 = ssub.s32 64, 64
      %29 = vsyncadd [#allocation3], %s28
      %s31 = sshll.u32 [#allocation2], 4
      %s32 = int_to_ptr.vmem [resolvable:$true] %s31
      %34 = dma.hbm_to_vmem [thread:$0]  %s1, 64, %s32, [#allocation3]
    $region9: #{tpu_custom_call.1} parent=1 // pred_fallthru
      _
    // Predicated region
    $region10: #{tpu_custom_call.1} parent=1 // pred_check
      _
    $region11: #{tpu_custom_call.1} parent=1 // pred_check_branch
      %36 = sbr.rel (0) target = $region13
    $region12: #{tpu_custom_call.1} parent=1 // pred_region
      %s38 = ssub.s32 16, 16
      %39 = vsyncadd [#allocation7], %s38
      %s41 = sshll.u32 [#allocation6], 4
      %s42 = int_to_ptr.vmem [resolvable:$true] %s41
      %44 = dma.hbm_to_vmem [thread:$0]  %s2, 16, %s42, [#allocation7]
    $region13: #{tpu_custom_call.1} parent=1 // pred_fallthru
      _
    // Predicated region
    $region14: #{tpu_custom_call.1} parent=1 // pred_check
      _
    $region15: #{tpu_custom_call.1} parent=1 // pred_check_branch
      %46 = sbr.rel (0) target = $region17
    $region16: #{tpu_custom_call.1} parent=1 // pred_region
      _
    $region17: #{tpu_custom_call.1} parent=1 // pred_fallthru
      _
    // Predicated region
    $region18: #{tpu_custom_call.1} parent=1 // pred_check
      _
    $region19: #{tpu_custom_call.1} parent=1 // pred_check_branch
      %48 = sbr.rel (0) target = $region21
    $region20: #{tpu_custom_call.1} parent=1 // pred_region
      %s50 = ssub.s32 512, 512
      %51 = vsyncadd [#allocation7], %s50
      %s52 = sshll.u32 [#allocation8], 4
      %s53 = int_to_ptr.vmem [resolvable:$true] %s52
      %58 = dma.hbm_to_vmem [thread:$0]  %s4, 512, %s53, [#allocation7], 128, 128, 8
    $region21: #{tpu_custom_call.1} parent=1 // pred_fallthru
      _
    // Predicated region
    $region22: #{tpu_custom_call.1} parent=1 // pred_check
      _
    $region23: #{tpu_custom_call.1} parent=1 // pred_check_branch
      %60 = sbr.rel (0) target = $region25
    $region24: #{tpu_custom_call.1} parent=1 // pred_region
      %s62 = ssub.s32 16, 16
      %63 = vsyncadd [#allocation10], %s62
      %s65 = sshll.u32 [#allocation9], 4
      %s66 = int_to_ptr.vmem [resolvable:$true] %s65
      %68 = dma.hbm_to_vmem [thread:$0]  %s5, 16, %s66, [#allocation10]
    $region25: #{tpu_custom_call.1} parent=1 // pred_fallthru
      _
    // Predicated region
    $region26: #{tpu_custom_call.1} parent=1 // pred_check
      _
    $region27: #{tpu_custom_call.1} parent=1 // pred_check_branch
      %70 = sbr.rel (0) target = $region29
    $region28: #{tpu_custom_call.1} parent=1 // pred_region
      %s72 = ssub.s32 16, 16
      %73 = vsyncadd [#allocation10], %s72
      %s75 = sshll.u32 [#allocation11], 4
      %s76 = int_to_ptr.vmem [resolvable:$true] %s75
      %78 = dma.hbm_to_vmem [thread:$0]  %s6, 16, %s76, [#allocation10]
    $region29: #{tpu_custom_call.1} parent=1 // pred_fallthru
      _
    // Predicated region
    $region30: #{tpu_custom_call.1} parent=1 // pred_check
      _
    $region31: #{tpu_custom_call.1} parent=1 // pred_check_branch
      %80 = sbr.rel (0) target = $region33
    $region32: #{tpu_custom_call.1} parent=1 // pred_region
      _
    $region33: #{tpu_custom_call.1} parent=1 // pred_fallthru
      _
    // Predicated region
    $region34: #{tpu_custom_call.1} parent=1 // pred_check
      _
    $region35: #{tpu_custom_call.1} parent=1 // pred_check_branch
      %82 = sbr.rel (0) target = $region37
    $region36: #{tpu_custom_call.1} parent=1 // pred_region
      _
    $region37: #{tpu_custom_call.1} parent=1 // pred_fallthru
      _
    // Predicated region
    $region38: #{tpu_custom_call.1} parent=1 // pred_check
      _
    $region39: #{tpu_custom_call.1} parent=1 // pred_check_branch
      %84 = sbr.rel (0) target = $region41
    $region40: #{tpu_custom_call.1} parent=1 // pred_region
      %85 = dma.done [#allocation3], 64
    $region41: #{tpu_custom_call.1} parent=1 // pred_fallthru
      _
    // Predicated region
    $region42: #{tpu_custom_call.1} parent=1 // pred_check
      _
    $region43: #{tpu_custom_call.1} parent=1 // pred_check_branch
      %87 = sbr.rel (0) target = $region45
    $region44: #{tpu_custom_call.1} parent=1 // pred_region
      %88 = dma.done [#allocation7], 16
    $region45: #{tpu_custom_call.1} parent=1 // pred_fallthru
      _
    // Predicated region
    $region46: #{tpu_custom_call.1} parent=1 // pred_check
      _
    $region47: #{tpu_custom_call.1} parent=1 // pred_check_branch
      %90 = sbr.rel (0) target = $region49
    $region48: #{tpu_custom_call.1} parent=1 // pred_region
      %91 = dma.done [#allocation7], 512
    $region49: #{tpu_custom_call.1} parent=1 // pred_fallthru
      _
    // Predicated region
    $region50: #{tpu_custom_call.1} parent=1 // pred_check
      _
    $region51: #{tpu_custom_call.1} parent=1 // pred_check_branch
      %93 = sbr.rel (0) target = $region53
    $region52: #{tpu_custom_call.1} parent=1 // pred_region
      %94 = dma.done [#allocation10], 16
    $region53: #{tpu_custom_call.1} parent=1 // pred_fallthru
      _
    // Predicated region
    $region54: #{tpu_custom_call.1} parent=1 // pred_check
      _
    $region55: #{tpu_custom_call.1} parent=1 // pred_check_branch
      %96 = sbr.rel (0) target = $region57
    $region56: #{tpu_custom_call.1} parent=1 // pred_region
      %97 = dma.done [#allocation10], 16
    $region57: #{tpu_custom_call.1} parent=1 // pred_fallthru
      _
    %v98 = vld [vmem:[%s0] sm:$0xff]
    %v99 = vld [vmem:[%s0 + $0x8] sm:$0xff]
    %v100 = vld [vmem:[%s0 + $0x10] sm:$0xff]
    %v101 = vld [vmem:[%s0 + $0x18] sm:$0xff]
    %v102 = vld [vmem:[%s0 + $0x20] sm:$0xff]
    %v103 = vld [vmem:[%s0 + $0x28] sm:$0xff]
    %v104 = vld [vmem:[#allocation2] sm:$0xf]
    %106 = vset.pattern.permute.xlu0 0
    %107 = vperm.xlu0 %106, %v98
    %v108 = vpop.permute.xlu0 %107
    %111 = vset.pattern.permute.xlu0 0
    %112 = vperm.xlu0 %111, %v99
    %v113 = vpop.permute.xlu0 %112
    %116 = vset.pattern.permute.xlu0 0
    %117 = vperm.xlu0 %116, %v100
    %v118 = vpop.permute.xlu0 %117
    %121 = vset.pattern.permute.xlu0 0
    %122 = vperm.xlu0 %121, %v101
    %v123 = vpop.permute.xlu0 %122
    %126 = vset.pattern.permute.xlu0 0
    %127 = vperm.xlu0 %126, %v102
    %v128 = vpop.permute.xlu0 %127
    %131 = vset.pattern.permute.xlu0 0
    %132 = vperm.xlu0 %131, %v103
    %v133 = vpop.permute.xlu0 %132
    %v135 = vlaneseq
    %v136 = vshrl.u32 %v135, 7
    %v137 = vsub.s32 0, %v136
    %v138 = vrot.slane %v104, %v137
    %v139 = vmul.f32 %v108, %v138
    %v140 = vmul.f32 %v113, %v138
    %v141 = vmul.f32 %v118, %v138
    %v142 = vmul.f32 %v123, %v138
    %v143 = vmul.f32 %v128, %v138
    %v144 = vmul.f32 %v133, %v138
    %145 = vset.pattern.permute.xlu0 1
    %146 = vperm.xlu0 %145, %v98
    %v147 = vpop.permute.xlu0 %146
    %149 = vset.pattern.permute.xlu0 1
    %150 = vperm.xlu0 %149, %v99
    %v151 = vpop.permute.xlu0 %150
    %153 = vset.pattern.permute.xlu0 1
    %154 = vperm.xlu0 %153, %v100
    %v155 = vpop.permute.xlu0 %154
    %157 = vset.pattern.permute.xlu0 1
    %158 = vperm.xlu0 %157, %v101
    %v159 = vpop.permute.xlu0 %158
    %161 = vset.pattern.permute.xlu0 1
    %162 = vperm.xlu0 %161, %v102
    %v163 = vpop.permute.xlu0 %162
    %165 = vset.pattern.permute.xlu0 1
    %166 = vperm.xlu0 %165, %v103
    %v167 = vpop.permute.xlu0 %166
    %v169 = vlaneseq
    %v170 = vshrl.u32 %v169, 7
    %v171 = vsub.s32 1, %v170
    %v172 = vrot.slane %v104, %v171
    %v173 = vmul.f32 %v147, %v172
    %v174 = vmul.f32 %v151, %v172
    %v175 = vmul.f32 %v155, %v172
    %v176 = vmul.f32 %v159, %v172
    %v177 = vmul.f32 %v163, %v172
    %v178 = vmul.f32 %v167, %v172
    %v179 = vadd.f32 %v139, %v173
    %v180 = vadd.f32 %v140, %v174
    %v181 = vadd.f32 %v141, %v175
    %v182 = vadd.f32 %v142, %v176
    %v183 = vadd.f32 %v143, %v177
    %v184 = vadd.f32 %v144, %v178
    %185 = vset.pattern.permute.xlu0 2
    %186 = vperm.xlu0 %185, %v98
    %v187 = vpop.permute.xlu0 %186
    %189 = vset.pattern.permute.xlu0 2
    %190 = vperm.xlu0 %189, %v99
    %v191 = vpop.permute.xlu0 %190
    %193 = vset.pattern.permute.xlu0 2
    %194 = vperm.xlu0 %193, %v100
    %v195 = vpop.permute.xlu0 %194
    %197 = vset.pattern.permute.xlu0 2
    %198 = vperm.xlu0 %197, %v101
    %v199 = vpop.permute.xlu0 %198
    %201 = vset.pattern.permute.xlu0 2
    %202 = vperm.xlu0 %201, %v102
    %v203 = vpop.permute.xlu0 %202
    %205 = vset.pattern.permute.xlu0 2
    %206 = vperm.xlu0 %205, %v103
    %v207 = vpop.permute.xlu0 %206
    %v209 = vlaneseq
    %v210 = vshrl.u32 %v209, 7
    %v211 = vsub.s32 2, %v210
    %v212 = vrot.slane %v104, %v211
    %v213 = vmul.f32 %v187, %v212
    %v214 = vmul.f32 %v191, %v212
    %v215 = vmul.f32 %v195, %v212
    %v216 = vmul.f32 %v199, %v212
    %v217 = vmul.f32 %v203, %v212
    %v218 = vmul.f32 %v207, %v212
    %v219 = vadd.f32 %v179, %v213
    %v220 = vadd.f32 %v180, %v214
    %v221 = vadd.f32 %v181, %v215
    %v222 = vadd.f32 %v182, %v216
    %v223 = vadd.f32 %v183, %v217
    %v224 = vadd.f32 %v184, %v218
    %225 = vset.pattern.permute.xlu0 3
    %226 = vperm.xlu0 %225, %v98
    %v227 = vpop.permute.xlu0 %226
    %229 = vset.pattern.permute.xlu0 3
    %230 = vperm.xlu0 %229, %v99
    %v231 = vpop.permute.xlu0 %230
    %233 = vset.pattern.permute.xlu0 3
    %234 = vperm.xlu0 %233, %v100
    %v235 = vpop.permute.xlu0 %234
    %237 = vset.pattern.permute.xlu0 3
    %238 = vperm.xlu0 %237, %v101
    %v239 = vpop.permute.xlu0 %238
    %241 = vset.pattern.permute.xlu0 3
    %242 = vperm.xlu0 %241, %v102
    %v243 = vpop.permute.xlu0 %242
    %245 = vset.pattern.permute.xlu0 3
    %246 = vperm.xlu0 %245, %v103
    %v247 = vpop.permute.xlu0 %246
    %v249 = vlaneseq
    %v250 = vshrl.u32 %v249, 7
    %v251 = vsub.s32 3, %v250
    %v252 = vrot.slane %v104, %v251
    %v253 = vmul.f32 %v227, %v252
    %v254 = vmul.f32 %v231, %v252
    %v255 = vmul.f32 %v235, %v252
    %v256 = vmul.f32 %v239, %v252
    %v257 = vmul.f32 %v243, %v252
    %v258 = vmul.f32 %v247, %v252
    %v259 = vadd.f32 %v219, %v253
    %v260 = vadd.f32 %v220, %v254
    %v261 = vadd.f32 %v221, %v255
    %v262 = vadd.f32 %v222, %v256
    %v263 = vadd.f32 %v223, %v257
    %v264 = vadd.f32 %v224, %v258
    %v265 = vld [vmem:[#allocation6] sm:$0x1]
    %v267 = vlaneseq
    %v268 = vshrl.u32 %v267, 7
    %v269 = vsub.s32 0, %v268
    %v270 = vrot.slane %v265, %v269
    %v272 = vadd.f32 %v259, %v270
    %v273 = vadd.f32 %v260, %v270
    %v274 = vadd.f32 %v261, %v270
    %v275 = vadd.f32 %v262, %v270
    %v276 = vadd.f32 %v263, %v270
    %v277 = vadd.f32 %v264, %v270
    %v278 = vmax.f32 %v272, 0.0
    %v279 = vmax.f32 %v273, 0.0
    %v280 = vmax.f32 %v274, 0.0
    %v281 = vmax.f32 %v275, 0.0
    %v282 = vmax.f32 %v276, 0.0
    %v283 = vmax.f32 %v277, 0.0
    %v284 = vld [vmem:[%s3] sm:$0xff]
    %v285 = vld [vmem:[%s3 + $0x8] sm:$0xff]
    %v286 = vld [vmem:[%s3 + $0x10] sm:$0xff]
    %v287 = vld [vmem:[%s3 + $0x18] sm:$0xff]
    %v288 = vld [vmem:[#allocation9] sm:$0x1]
    %v290 = vlaneseq
    %v291 = vshrl.u32 %v290, 7
    %v292 = vsub.s32 0, %v291
    %v293 = vrot.slane %v288, %v292
    %vm295 = vcmask 261120
    %v297 = vsel %vm295, %v278, 0
    %v300 = vsel %vm295, %v279, 0
    %v303 = vsel %vm295, %v280, 0
    %v306 = vsel %vm295, %v281, 0
    %308 = vmatprep.subr.mxu0 0.0
    %309 = vmatpush1.msra.mxu0 0.0
    %310 = vmatprep.subr.mxu0 0.0
    %311 = vmatpush1.msra.mxu0 0.0
    %312 = vmatprep.subr.mxu0 0.0
    %313 = vmatpush1.msra.mxu0 0.0
    %314 = vmatprep.subr.mxu0 0.0
    %315 = vmatpush1.msra.mxu0 0.0
    %316 = vmatprep.subr.mxu0 0.0
    %317 = vmatpush1.msra.mxu0 0.0
    %318 = vmatprep.subr.mxu0 0.0
    %319 = vmatpush1.msra.mxu0 0.0
    %320 = vmatprep.subr.mxu0 0.0
    %321 = vmatpush1.msra.mxu0 0.0
    %322 = vmatprep.subr.mxu0 0.0
    %323 = vmatpush1.msra.mxu0 0.0
    %324 = vmatprep.subr.mxu0 0.0
    %325 = vmatpush1.msra.mxu0 0.0
    %326 = vmatprep.subr.mxu0 0.0
    %327 = vmatpush1.msra.mxu0 0.0
    %328 = vmatprep.subr.mxu0 0.0
    %329 = vmatpush1.msra.mxu0 0.0
    %330 = vmatprep.subr.mxu0 0.0
    %331 = vmatpush1.msra.mxu0 0.0
    %332 = vmatprep.subr.mxu0 0.0
    %333 = vmatpush1.msra.mxu0 %v287
    %334 = vmatprep.subr.mxu0 0.0
    %335 = vmatpush1.msra.mxu0 %v286
    %336 = vmatprep.subr.mxu0 0.0
    %337 = vmatpush1.msra.mxu0 %v285
    %338 = vmatprep.subr.mxu0 0.0
    %339 = vmatpush1.msra.mxu0 %v284
    %340 = vmatprep.subr.mxu0 0.0
    %341 = vmatpush2.msra.mxu0 0.0
    %342 = vmatprep.subr.mxu0 0.0
    %343 = vmatpush2.msra.mxu0 0.0
    %344 = vmatprep.subr.mxu0 0.0
    %345 = vmatpush2.msra.mxu0 0.0
    %346 = vmatprep.subr.mxu0 0.0
    %347 = vmatpush2.msra.mxu0 0.0
    %348 = vmatprep.subr.mxu0 0.0
    %349 = vmatpush2.msra.mxu0 0.0
    %350 = vmatprep.subr.mxu0 0.0
    %351 = vmatpush2.msra.mxu0 0.0
    %352 = vmatprep.subr.mxu0 0.0
    %353 = vmatpush2.msra.mxu0 0.0
    %354 = vmatprep.subr.mxu0 0.0
    %355 = vmatpush2.msra.mxu0 0.0
    %356 = vmatprep.subr.mxu0 0.0
    %357 = vmatpush2.msra.mxu0 0.0
    %358 = vmatprep.subr.mxu0 0.0
    %359 = vmatpush2.msra.mxu0 0.0
    %360 = vmatprep.subr.mxu0 0.0
    %361 = vmatpush2.msra.mxu0 0.0
    %362 = vmatprep.subr.mxu0 0.0
    %363 = vmatpush2.msra.mxu0 0.0
    %364 = vmatprep.subr.mxu0 0.0
    %365 = vmatpush2.msra.mxu0 0.0
    %366 = vmatprep.subr.mxu0 0.0
    %367 = vmatpush2.msra.mxu0 0.0
    %368 = vmatprep.subr.mxu0 0.0
    %369 = vmatpush2.msra.mxu0 0.0
    %370 = vmatprep.subr.mxu0 0.0
    %371 = vmatpush2.msra.mxu0 0.0
    %372 = vmatprep.mubr.f32.mxu0 0.0
    %373 = vmatmul.mubr.f32.gmra.mxu0 %v297
    %v374 = vpop.f32.mrf.mxu0
    %v375 = vadd.f32 %v293, %v374
    %v376 = vpop.f32.mrf.mxu0
    %377 = vmatprep.mubr.f32.mxu0 0.0
    %378 = vmatmul.mubr.f32.gmra.mxu0 %v300
    %v379 = vpop.f32.mrf.mxu0
    %v380 = vadd.f32 %v293, %v379
    %v381 = vpop.f32.mrf.mxu0
    %382 = vmatprep.mubr.f32.mxu0 0.0
    %383 = vmatmul.mubr.f32.gmra.mxu0 %v303
    %v384 = vpop.f32.mrf.mxu0
    %v385 = vadd.f32 %v293, %v384
    %v386 = vpop.f32.mrf.mxu0
    %387 = vmatprep.mubr.f32.mxu0 0.0
    %388 = vmatmul.mubr.f32.gmra.mxu0 %v306
    %v389 = vpop.f32.mrf.mxu0
    %v390 = vadd.f32 %v293, %v389
    %v391 = vpop.f32.mrf.mxu0
    %392 = vdwg.mxu0
    %v393 = vld [vmem:[#allocation8] sm:$0xff]
    %v394 = vld [vmem:[#allocation8 + $0x8] sm:$0xff]
    %v395 = vld [vmem:[#allocation8 + $0x10] sm:$0xff]
    %v396 = vld [vmem:[#allocation8 + $0x18] sm:$0xff]
    %v397 = vld [vmem:[#allocation11] sm:$0x1]
    %v399 = vlaneseq
    %v400 = vshrl.u32 %v399, 7
    %v401 = vsub.s32 0, %v400
    %v402 = vrot.slane %v397, %v401
    %v405 = vsel %vm295, 0.0, 0
    %407 = vmatprep.subr.mxu0 0.0
    %408 = vmatpush1.msra.mxu0 0.0
    %409 = vmatprep.subr.mxu0 0.0
    %410 = vmatpush1.msra.mxu0 0.0
    %411 = vmatprep.subr.mxu0 0.0
    %412 = vmatpush1.msra.mxu0 0.0
    %413 = vmatprep.subr.mxu0 0.0
    %414 = vmatpush1.msra.mxu0 0.0
    %415 = vmatprep.subr.mxu0 0.0
    %416 = vmatpush1.msra.mxu0 0.0
    %417 = vmatprep.subr.mxu0 0.0
    %418 = vmatpush1.msra.mxu0 0.0
    %419 = vmatprep.subr.mxu0 0.0
    %420 = vmatpush1.msra.mxu0 0.0
    %421 = vmatprep.subr.mxu0 0.0
    %422 = vmatpush1.msra.mxu0 0.0
    %423 = vmatprep.subr.mxu0 0.0
    %424 = vmatpush1.msra.mxu0 0.0
    %425 = vmatprep.subr.mxu0 0.0
    %426 = vmatpush1.msra.mxu0 0.0
    %427 = vmatprep.subr.mxu0 0.0
    %428 = vmatpush1.msra.mxu0 0.0
    %429 = vmatprep.subr.mxu0 0.0
    %430 = vmatpush1.msra.mxu0 0.0
    %431 = vmatprep.subr.mxu0 0.0
    %432 = vmatpush1.msra.mxu0 %v396
    %433 = vmatprep.subr.mxu0 0.0
    %434 = vmatpush1.msra.mxu0 %v395
    %435 = vmatprep.subr.mxu0 0.0
    %436 = vmatpush1.msra.mxu0 %v394
    %437 = vmatprep.subr.mxu0 0.0
    %438 = vmatpush1.msra.mxu0 %v393
    %439 = vmatprep.subr.mxu0 0.0
    %440 = vmatpush2.msra.mxu0 0.0
    %441 = vmatprep.subr.mxu0 0.0
    %442 = vmatpush2.msra.mxu0 0.0
    %443 = vmatprep.subr.mxu0 0.0
    %444 = vmatpush2.msra.mxu0 0.0
    %445 = vmatprep.subr.mxu0 0.0
    %446 = vmatpush2.msra.mxu0 0.0
    %447 = vmatprep.subr.mxu0 0.0
    %448 = vmatpush2.msra.mxu0 0.0
    %449 = vmatprep.subr.mxu0 0.0
    %450 = vmatpush2.msra.mxu0 0.0
    %451 = vmatprep.subr.mxu0 0.0
    %452 = vmatpush2.msra.mxu0 0.0
    %453 = vmatprep.subr.mxu0 0.0
    %454 = vmatpush2.msra.mxu0 0.0
    %455 = vmatprep.subr.mxu0 0.0
    %456 = vmatpush2.msra.mxu0 0.0
    %457 = vmatprep.subr.mxu0 0.0
    %458 = vmatpush2.msra.mxu0 0.0
    %459 = vmatprep.subr.mxu0 0.0
    %460 = vmatpush2.msra.mxu0 0.0
    %461 = vmatprep.subr.mxu0 0.0
    %462 = vmatpush2.msra.mxu0 0.0
    %463 = vmatprep.subr.mxu0 0.0
    %464 = vmatpush2.msra.mxu0 0.0
    %465 = vmatprep.subr.mxu0 0.0
    %466 = vmatpush2.msra.mxu0 0.0
    %467 = vmatprep.subr.mxu0 0.0
    %468 = vmatpush2.msra.mxu0 0.0
    %469 = vmatprep.subr.mxu0 0.0
    %470 = vmatpush2.msra.mxu0 0.0
    %471 = vmatprep.mubr.f32.mxu0 0.0
    %472 = vmatmul.mubr.f32.gmra.mxu0 %v405
    %v473 = vpop.f32.mrf.mxu0
    %v474 = vadd.f32 %v402, %v473
    %v475 = vpop.f32.mrf.mxu0
    %476 = vdwg.mxu0
    %v477 = vadd.f32 %v375, %v474
    %v478 = vxor.u32 %v477, 2147483648
    %v479 = vmul.f32 %v478, 1.442695
    %v480 = vpow.pop %v479
    %v481 = vadd.f32 %v480, 1.0
    %v482 = vrcp.pop %v481
    %v483 = vmul.f32 1.0, %v482
    %485 = vrot.lane.b32.xlu0 %v474, 64
    %v486 = vpop.permute.xlu0 %485
    %v488 = vmul.f32 %v483, %v486
    %490 = vrot.lane.b32.xlu0 %v488, 64
    %v491 = vpop.permute.xlu0 %490
    %v493 = vadd.f32 %v375, %v491
    %v494 = vtanh.pop %v493
    %v495 = vsub.f32 1.0, %v483
    %497 = vrot.lane.b32.xlu0 %v494, 96
    %v498 = vpop.permute.xlu0 %497
    %v500 = vmul.f32 %v495, %v498
    %v501 = vmul.f32 %v483, 0.0
    %v502 = vadd.f32 %v500, %v501
    %504 = vrot.lane.b32.xlu0 %v502, 96
    %v505 = vpop.permute.xlu0 %504
    %v506 = vsel %vm295, %v505, 0
    %508 = vmatprep.subr.mxu0 0.0
    %509 = vmatpush1.msra.mxu0 0.0
    %510 = vmatprep.subr.mxu0 0.0
    %511 = vmatpush1.msra.mxu0 0.0
    %512 = vmatprep.subr.mxu0 0.0
    %513 = vmatpush1.msra.mxu0 0.0
    %514 = vmatprep.subr.mxu0 0.0
    %515 = vmatpush1.msra.mxu0 0.0
    %516 = vmatprep.subr.mxu0 0.0
    %517 = vmatpush1.msra.mxu0 0.0
    %518 = vmatprep.subr.mxu0 0.0
    %519 = vmatpush1.msra.mxu0 0.0
    %520 = vmatprep.subr.mxu0 0.0
    %521 = vmatpush1.msra.mxu0 0.0
    %522 = vmatprep.subr.mxu0 0.0
    %523 = vmatpush1.msra.mxu0 0.0
    %524 = vmatprep.subr.mxu0 0.0
    %525 = vmatpush1.msra.mxu0 0.0
    %526 = vmatprep.subr.mxu0 0.0
    %527 = vmatpush1.msra.mxu0 0.0
    %528 = vmatprep.subr.mxu0 0.0
    %529 = vmatpush1.msra.mxu0 0.0
    %530 = vmatprep.subr.mxu0 0.0
    %531 = vmatpush1.msra.mxu0 0.0
    %532 = vmatprep.subr.mxu0 0.0
    %533 = vmatpush1.msra.mxu0 %v396
    %534 = vmatprep.subr.mxu0 0.0
    %535 = vmatpush1.msra.mxu0 %v395
    %536 = vmatprep.subr.mxu0 0.0
    %537 = vmatpush1.msra.mxu0 %v394
    %538 = vmatprep.subr.mxu0 0.0
    %539 = vmatpush1.msra.mxu0 %v393
    %540 = vmatprep.subr.mxu0 0.0
    %541 = vmatpush2.msra.mxu0 0.0
    %542 = vmatprep.subr.mxu0 0.0
    %543 = vmatpush2.msra.mxu0 0.0
    %544 = vmatprep.subr.mxu0 0.0
    %545 = vmatpush2.msra.mxu0 0.0
    %546 = vmatprep.subr.mxu0 0.0
    %547 = vmatpush2.msra.mxu0 0.0
    %548 = vmatprep.subr.mxu0 0.0
    %549 = vmatpush2.msra.mxu0 0.0
    %550 = vmatprep.subr.mxu0 0.0
    %551 = vmatpush2.msra.mxu0 0.0
    %552 = vmatprep.subr.mxu0 0.0
    %553 = vmatpush2.msra.mxu0 0.0
    %554 = vmatprep.subr.mxu0 0.0
    %555 = vmatpush2.msra.mxu0 0.0
    %556 = vmatprep.subr.mxu0 0.0
    %557 = vmatpush2.msra.mxu0 0.0
    %558 = vmatprep.subr.mxu0 0.0
    %559 = vmatpush2.msra.mxu0 0.0
    %560 = vmatprep.subr.mxu0 0.0
    %561 = vmatpush2.msra.mxu0 0.0
    %562 = vmatprep.subr.mxu0 0.0
    %563 = vmatpush2.msra.mxu0 0.0
    %564 = vmatprep.subr.mxu0 0.0
    %565 = vmatpush2.msra.mxu0 0.0
    %566 = vmatprep.subr.mxu0 0.0
    %567 = vmatpush2.msra.mxu0 0.0
    %568 = vmatprep.subr.mxu0 0.0
    %569 = vmatpush2.msra.mxu0 0.0
    %570 = vmatprep.subr.mxu0 0.0
    %571 = vmatpush2.msra.mxu0 0.0
    %572 = vmatprep.mubr.f32.mxu0 0.0
    %573 = vmatmul.mubr.f32.gmra.mxu0 %v506
    %v574 = vpop.f32.mrf.mxu0
    %v575 = vadd.f32 %v402, %v574
    %v576 = vpop.f32.mrf.mxu0
    %577 = vdwg.mxu0
    %v578 = vadd.f32 %v380, %v575
    %v579 = vxor.u32 %v578, 2147483648
    %v580 = vmul.f32 %v579, 1.442695
    %v581 = vpow.pop %v580
    %v582 = vadd.f32 %v581, 1.0
    %v583 = vrcp.pop %v582
    %v584 = vmul.f32 1.0, %v583
    %586 = vrot.lane.b32.xlu0 %v575, 64
    %v587 = vpop.permute.xlu0 %586
    %v589 = vmul.f32 %v584, %v587
    %591 = vrot.lane.b32.xlu0 %v589, 64
    %v592 = vpop.permute.xlu0 %591
    %v594 = vadd.f32 %v380, %v592
    %v595 = vtanh.pop %v594
    %v596 = vsub.f32 1.0, %v584
    %598 = vrot.lane.b32.xlu0 %v595, 96
    %v599 = vpop.permute.xlu0 %598
    %v601 = vmul.f32 %v596, %v599
    %v602 = vmul.f32 %v584, %v502
    %v603 = vadd.f32 %v601, %v602
    %605 = vrot.lane.b32.xlu0 %v603, 96
    %v606 = vpop.permute.xlu0 %605
    %v607 = vsel %vm295, %v606, 0
    %609 = vmatprep.subr.mxu0 0.0
    %610 = vmatpush1.msra.mxu0 0.0
    %611 = vmatprep.subr.mxu0 0.0
    %612 = vmatpush1.msra.mxu0 0.0
    %613 = vmatprep.subr.mxu0 0.0
    %614 = vmatpush1.msra.mxu0 0.0
    %615 = vmatprep.subr.mxu0 0.0
    %616 = vmatpush1.msra.mxu0 0.0
    %617 = vmatprep.subr.mxu0 0.0
    %618 = vmatpush1.msra.mxu0 0.0
    %619 = vmatprep.subr.mxu0 0.0
    %620 = vmatpush1.msra.mxu0 0.0
    %621 = vmatprep.subr.mxu0 0.0
    %622 = vmatpush1.msra.mxu0 0.0
    %623 = vmatprep.subr.mxu0 0.0
    %624 = vmatpush1.msra.mxu0 0.0
    %625 = vmatprep.subr.mxu0 0.0
    %626 = vmatpush1.msra.mxu0 0.0
    %627 = vmatprep.subr.mxu0 0.0
    %628 = vmatpush1.msra.mxu0 0.0
    %629 = vmatprep.subr.mxu0 0.0
    %630 = vmatpush1.msra.mxu0 0.0
    %631 = vmatprep.subr.mxu0 0.0
    %632 = vmatpush1.msra.mxu0 0.0
    %633 = vmatprep.subr.mxu0 0.0
    %634 = vmatpush1.msra.mxu0 %v396
    %635 = vmatprep.subr.mxu0 0.0
    %636 = vmatpush1.msra.mxu0 %v395
    %637 = vmatprep.subr.mxu0 0.0
    %638 = vmatpush1.msra.mxu0 %v394
    %639 = vmatprep.subr.mxu0 0.0
    %640 = vmatpush1.msra.mxu0 %v393
    %641 = vmatprep.subr.mxu0 0.0
    %642 = vmatpush2.msra.mxu0 0.0
    %643 = vmatprep.subr.mxu0 0.0
    %644 = vmatpush2.msra.mxu0 0.0
    %645 = vmatprep.subr.mxu0 0.0
    %646 = vmatpush2.msra.mxu0 0.0
    %647 = vmatprep.subr.mxu0 0.0
    %648 = vmatpush2.msra.mxu0 0.0
    %649 = vmatprep.subr.mxu0 0.0
    %650 = vmatpush2.msra.mxu0 0.0
    %651 = vmatprep.subr.mxu0 0.0
    %652 = vmatpush2.msra.mxu0 0.0
    %653 = vmatprep.subr.mxu0 0.0
    %654 = vmatpush2.msra.mxu0 0.0
    %655 = vmatprep.subr.mxu0 0.0
    %656 = vmatpush2.msra.mxu0 0.0
    %657 = vmatprep.subr.mxu0 0.0
    %658 = vmatpush2.msra.mxu0 0.0
    %659 = vmatprep.subr.mxu0 0.0
    %660 = vmatpush2.msra.mxu0 0.0
    %661 = vmatprep.subr.mxu0 0.0
    %662 = vmatpush2.msra.mxu0 0.0
    %663 = vmatprep.subr.mxu0 0.0
    %664 = vmatpush2.msra.mxu0 0.0
    %665 = vmatprep.subr.mxu0 0.0
    %666 = vmatpush2.msra.mxu0 0.0
    %667 = vmatprep.subr.mxu0 0.0
    %668 = vmatpush2.msra.mxu0 0.0
    %669 = vmatprep.subr.mxu0 0.0
    %670 = vmatpush2.msra.mxu0 0.0
    %671 = vmatprep.subr.mxu0 0.0
    %672 = vmatpush2.msra.mxu0 0.0
    %673 = vmatprep.mubr.f32.mxu0 0.0
    %674 = vmatmul.mubr.f32.gmra.mxu0 %v607
    %v675 = vpop.f32.mrf.mxu0
    %v676 = vadd.f32 %v402, %v675
    %v677 = vpop.f32.mrf.mxu0
    %678 = vdwg.mxu0
    %v679 = vadd.f32 %v385, %v676
    %v680 = vxor.u32 %v679, 2147483648
    %v681 = vmul.f32 %v680, 1.442695
    %v682 = vpow.pop %v681
    %v683 = vadd.f32 %v682, 1.0
    %v684 = vrcp.pop %v683
    %v685 = vmul.f32 1.0, %v684
    %687 = vrot.lane.b32.xlu0 %v676, 64
    %v688 = vpop.permute.xlu0 %687
    %v690 = vmul.f32 %v685, %v688
    %692 = vrot.lane.b32.xlu0 %v690, 64
    %v693 = vpop.permute.xlu0 %692
    %v695 = vadd.f32 %v385, %v693
    %v696 = vtanh.pop %v695
    %v697 = vsub.f32 1.0, %v685
    %699 = vrot.lane.b32.xlu0 %v696, 96
    %v700 = vpop.permute.xlu0 %699
    %v702 = vmul.f32 %v697, %v700
    %v703 = vmul.f32 %v685, %v603
    %v704 = vadd.f32 %v702, %v703
    %706 = vrot.lane.b32.xlu0 %v704, 96
    %v707 = vpop.permute.xlu0 %706
    %v708 = vsel %vm295, %v707, 0
    %710 = vmatprep.subr.mxu0 0.0
    %711 = vmatpush1.msra.mxu0 0.0
    %712 = vmatprep.subr.mxu0 0.0
    %713 = vmatpush1.msra.mxu0 0.0
    %714 = vmatprep.subr.mxu0 0.0
    %715 = vmatpush1.msra.mxu0 0.0
    %716 = vmatprep.subr.mxu0 0.0
    %717 = vmatpush1.msra.mxu0 0.0
    %718 = vmatprep.subr.mxu0 0.0
    %719 = vmatpush1.msra.mxu0 0.0
    %720 = vmatprep.subr.mxu0 0.0
    %721 = vmatpush1.msra.mxu0 0.0
    %722 = vmatprep.subr.mxu0 0.0
    %723 = vmatpush1.msra.mxu0 0.0
    %724 = vmatprep.subr.mxu0 0.0
    %725 = vmatpush1.msra.mxu0 0.0
    %726 = vmatprep.subr.mxu0 0.0
    %727 = vmatpush1.msra.mxu0 0.0
    %728 = vmatprep.subr.mxu0 0.0
    %729 = vmatpush1.msra.mxu0 0.0
    %730 = vmatprep.subr.mxu0 0.0
    %731 = vmatpush1.msra.mxu0 0.0
    %732 = vmatprep.subr.mxu0 0.0
    %733 = vmatpush1.msra.mxu0 0.0
    %734 = vmatprep.subr.mxu0 0.0
    %735 = vmatpush1.msra.mxu0 %v396
    %736 = vmatprep.subr.mxu0 0.0
    %737 = vmatpush1.msra.mxu0 %v395
    %738 = vmatprep.subr.mxu0 0.0
    %739 = vmatpush1.msra.mxu0 %v394
    %740 = vmatprep.subr.mxu0 0.0
    %741 = vmatpush1.msra.mxu0 %v393
    %742 = vmatprep.subr.mxu0 0.0
    %743 = vmatpush2.msra.mxu0 0.0
    %744 = vmatprep.subr.mxu0 0.0
    %745 = vmatpush2.msra.mxu0 0.0
    %746 = vmatprep.subr.mxu0 0.0
    %747 = vmatpush2.msra.mxu0 0.0
    %748 = vmatprep.subr.mxu0 0.0
    %749 = vmatpush2.msra.mxu0 0.0
    %750 = vmatprep.subr.mxu0 0.0
    %751 = vmatpush2.msra.mxu0 0.0
    %752 = vmatprep.subr.mxu0 0.0
    %753 = vmatpush2.msra.mxu0 0.0
    %754 = vmatprep.subr.mxu0 0.0
    %755 = vmatpush2.msra.mxu0 0.0
    %756 = vmatprep.subr.mxu0 0.0
    %757 = vmatpush2.msra.mxu0 0.0
    %758 = vmatprep.subr.mxu0 0.0
    %759 = vmatpush2.msra.mxu0 0.0
    %760 = vmatprep.subr.mxu0 0.0
    %761 = vmatpush2.msra.mxu0 0.0
    %762 = vmatprep.subr.mxu0 0.0
    %763 = vmatpush2.msra.mxu0 0.0
    %764 = vmatprep.subr.mxu0 0.0
    %765 = vmatpush2.msra.mxu0 0.0
    %766 = vmatprep.subr.mxu0 0.0
    %767 = vmatpush2.msra.mxu0 0.0
    %768 = vmatprep.subr.mxu0 0.0
    %769 = vmatpush2.msra.mxu0 0.0
    %770 = vmatprep.subr.mxu0 0.0
    %771 = vmatpush2.msra.mxu0 0.0
    %772 = vmatprep.subr.mxu0 0.0
    %773 = vmatpush2.msra.mxu0 0.0
    %774 = vmatprep.mubr.f32.mxu0 0.0
    %775 = vmatmul.mubr.f32.gmra.mxu0 %v708
    %v776 = vpop.f32.mrf.mxu0
    %v777 = vadd.f32 %v402, %v776
    %v778 = vpop.f32.mrf.mxu0
    %779 = vdwg.mxu0
    %v780 = vadd.f32 %v390, %v777
    %v781 = vxor.u32 %v780, 2147483648
    %v782 = vmul.f32 %v781, 1.442695
    %v783 = vpow.pop %v782
    %v784 = vadd.f32 %v783, 1.0
    %v785 = vrcp.pop %v784
    %v786 = vmul.f32 1.0, %v785
    %788 = vrot.lane.b32.xlu0 %v777, 64
    %v789 = vpop.permute.xlu0 %788
    %v791 = vmul.f32 %v786, %v789
    %793 = vrot.lane.b32.xlu0 %v791, 64
    %v794 = vpop.permute.xlu0 %793
    %v796 = vadd.f32 %v390, %v794
    %v797 = vtanh.pop %v796
    %v798 = vsub.f32 1.0, %v786
    %800 = vrot.lane.b32.xlu0 %v797, 96
    %v801 = vpop.permute.xlu0 %800
    %v803 = vmul.f32 %v798, %v801
    %v804 = vmul.f32 %v786, %v704
    %v805 = vadd.f32 %v803, %v804
    %807 = vrot.lane.b32.xlu0 %v805, 96
    %v808 = vpop.permute.xlu0 %807
    %810 = vst.msk [vmem:[#allocation15] sm:$0xff] %vm295, %v808
    %v811 = vld [vmem:[%s7] sm:$0xff]
    %v812 = vld [vmem:[%s7 + $0x8] sm:$0xff]
    %v813 = vld [vmem:[%s7 + $0x10] sm:$0xff]
    %v814 = vld [vmem:[%s7 + $0x18] sm:$0xff]
    %v815 = vld [vmem:[%s8] sm:$0x1]
    %v817 = vlaneseq
    %v818 = vshrl.u32 %v817, 7
    %v819 = vsub.s32 0, %v818
    %v820 = vrot.slane %v815, %v819
    %v822 = vsel %vm295, %v808, 0
    %824 = vmatprep.subr.mxu0 0.0
    %825 = vmatpush1.msra.mxu0 0.0
    %826 = vmatprep.subr.mxu0 0.0
    %827 = vmatpush1.msra.mxu0 0.0
    %828 = vmatprep.subr.mxu0 0.0
    %829 = vmatpush1.msra.mxu0 0.0
    %830 = vmatprep.subr.mxu0 0.0
    %831 = vmatpush1.msra.mxu0 0.0
    %832 = vmatprep.subr.mxu0 0.0
    %833 = vmatpush1.msra.mxu0 0.0
    %834 = vmatprep.subr.mxu0 0.0
    %835 = vmatpush1.msra.mxu0 0.0
    %836 = vmatprep.subr.mxu0 0.0
    %837 = vmatpush1.msra.mxu0 0.0
    %838 = vmatprep.subr.mxu0 0.0
    %839 = vmatpush1.msra.mxu0 0.0
    %840 = vmatprep.subr.mxu0 0.0
    %841 = vmatpush1.msra.mxu0 0.0
    %842 = vmatprep.subr.mxu0 0.0
    %843 = vmatpush1.msra.mxu0 0.0
    %844 = vmatprep.subr.mxu0 0.0
    %845 = vmatpush1.msra.mxu0 0.0
    %846 = vmatprep.subr.mxu0 0.0
    %847 = vmatpush1.msra.mxu0 0.0
    %848 = vmatprep.subr.mxu0 0.0
    %849 = vmatpush1.msra.mxu0 %v814
    %850 = vmatprep.subr.mxu0 0.0
    %851 = vmatpush1.msra.mxu0 %v813
    %852 = vmatprep.subr.mxu0 0.0
    %853 = vmatpush1.msra.mxu0 %v812
    %854 = vmatprep.subr.mxu0 0.0
    %855 = vmatpush1.msra.mxu0 %v811
    %856 = vmatprep.subr.mxu0 0.0
    %857 = vmatpush2.msra.mxu0 0.0
    %858 = vmatprep.subr.mxu0 0.0
    %859 = vmatpush2.msra.mxu0 0.0
    %860 = vmatprep.subr.mxu0 0.0
    %861 = vmatpush2.msra.mxu0 0.0
    %862 = vmatprep.subr.mxu0 0.0
    %863 = vmatpush2.msra.mxu0 0.0
    %864 = vmatprep.subr.mxu0 0.0
    %865 = vmatpush2.msra.mxu0 0.0
    %866 = vmatprep.subr.mxu0 0.0
    %867 = vmatpush2.msra.mxu0 0.0
    %868 = vmatprep.subr.mxu0 0.0
    %869 = vmatpush2.msra.mxu0 0.0
    %870 = vmatprep.subr.mxu0 0.0
    %871 = vmatpush2.msra.mxu0 0.0
    %872 = vmatprep.subr.mxu0 0.0
    %873 = vmatpush2.msra.mxu0 0.0
    %874 = vmatprep.subr.mxu0 0.0
    %875 = vmatpush2.msra.mxu0 0.0
    %876 = vmatprep.subr.mxu0 0.0
    %877 = vmatpush2.msra.mxu0 0.0
    %878 = vmatprep.subr.mxu0 0.0
    %879 = vmatpush2.msra.mxu0 0.0
    %880 = vmatprep.subr.mxu0 0.0
    %881 = vmatpush2.msra.mxu0 0.0
    %882 = vmatprep.subr.mxu0 0.0
    %883 = vmatpush2.msra.mxu0 0.0
    %884 = vmatprep.subr.mxu0 0.0
    %885 = vmatpush2.msra.mxu0 0.0
    %886 = vmatprep.subr.mxu0 0.0
    %887 = vmatpush2.msra.mxu0 0.0
    %888 = vmatprep.mubr.f32.mxu0 0.0
    %889 = vmatmul.mubr.f32.gmra.mxu0 %v822
    %v890 = vpop.f32.mrf.mxu0
    %v891 = vadd.f32 %v820, %v890
    %v892 = vpop.f32.mrf.mxu0
    %893 = vdwg.mxu0
    %v894 = vlaneseq
    %v895 = vshrl.u32 %v894, 7
    %v896 = vlaneseq
    %v897 = vand.u32 %v896, 127
    %vm898 = vcmp.eq.s32.totalorder %v895, %v897
    %v900 = vsel %vm295, %v282, 0
    %v903 = vsel %vm295, %v891, 0
    %905 = vmatprep.subr.mxu0 0.0
    %906 = vmatpush1.xpose.msra.mxu0 0.0
    %907 = vmatprep.subr.mxu0 0.0
    %908 = vmatpush1.xpose.msra.mxu0 0.0
    %909 = vmatprep.subr.mxu0 0.0
    %910 = vmatpush1.xpose.msra.mxu0 0.0
    %911 = vmatprep.subr.mxu0 0.0
    %912 = vmatpush1.xpose.msra.mxu0 0.0
    %913 = vmatprep.subr.mxu0 0.0
    %914 = vmatpush1.xpose.msra.mxu0 0.0
    %915 = vmatprep.subr.mxu0 0.0
    %916 = vmatpush1.xpose.msra.mxu0 0.0
    %917 = vmatprep.subr.mxu0 0.0
    %918 = vmatpush1.xpose.msra.mxu0 0.0
    %919 = vmatprep.subr.mxu0 0.0
    %920 = vmatpush1.xpose.msra.mxu0 0.0
    %921 = vmatprep.subr.mxu0 0.0
    %922 = vmatpush1.xpose.msra.mxu0 0.0
    %923 = vmatprep.subr.mxu0 0.0
    %924 = vmatpush1.xpose.msra.mxu0 0.0
    %925 = vmatprep.subr.mxu0 0.0
    %926 = vmatpush1.xpose.msra.mxu0 0.0
    %927 = vmatprep.subr.mxu0 0.0
    %928 = vmatpush1.xpose.msra.mxu0 0.0
    %929 = vmatprep.subr.mxu0 0.0
    %930 = vmatpush1.xpose.msra.mxu0 0.0
    %931 = vmatprep.subr.mxu0 0.0
    %932 = vmatpush1.xpose.msra.mxu0 0.0
    %933 = vmatprep.subr.mxu0 0.0
    %934 = vmatpush1.xpose.msra.mxu0 0.0
    %935 = vmatprep.subr.mxu0 0.0
    %936 = vmatpush1.xpose.msra.mxu0 %v903
    %937 = vmatprep.subr.mxu0 0.0
    %938 = vmatpush2.xpose.msra.mxu0 0.0
    %939 = vmatprep.subr.mxu0 0.0
    %940 = vmatpush2.xpose.msra.mxu0 0.0
    %941 = vmatprep.subr.mxu0 0.0
    %942 = vmatpush2.xpose.msra.mxu0 0.0
    %943 = vmatprep.subr.mxu0 0.0
    %944 = vmatpush2.xpose.msra.mxu0 0.0
    %945 = vmatprep.subr.mxu0 0.0
    %946 = vmatpush2.xpose.msra.mxu0 0.0
    %947 = vmatprep.subr.mxu0 0.0
    %948 = vmatpush2.xpose.msra.mxu0 0.0
    %949 = vmatprep.subr.mxu0 0.0
    %950 = vmatpush2.xpose.msra.mxu0 0.0
    %951 = vmatprep.subr.mxu0 0.0
    %952 = vmatpush2.xpose.msra.mxu0 0.0
    %953 = vmatprep.subr.mxu0 0.0
    %954 = vmatpush2.xpose.msra.mxu0 0.0
    %955 = vmatprep.subr.mxu0 0.0
    %956 = vmatpush2.xpose.msra.mxu0 0.0
    %957 = vmatprep.subr.mxu0 0.0
    %958 = vmatpush2.xpose.msra.mxu0 0.0
    %959 = vmatprep.subr.mxu0 0.0
    %960 = vmatpush2.xpose.msra.mxu0 0.0
    %961 = vmatprep.subr.mxu0 0.0
    %962 = vmatpush2.xpose.msra.mxu0 0.0
    %963 = vmatprep.subr.mxu0 0.0
    %964 = vmatpush2.xpose.msra.mxu0 0.0
    %965 = vmatprep.subr.mxu0 0.0
    %966 = vmatpush2.xpose.msra.mxu0 0.0
    %967 = vmatprep.subr.mxu0 0.0
    %968 = vmatpush2.xpose.msra.mxu0 0.0
    %969 = vmatprep.mubr.f32.mxu0 0.0
    %970 = vmatmul.mubr.f32.gmra.mxu0 %v900
    %v971 = vpop.f32.mrf.mxu0
    %v972 = vadd.f32 0.0, %v971
    %v973 = vpop.f32.mrf.mxu0
    %974 = vdwg.mxu0
    %vm975 = vcmask 64512
    %v976 = vsel %vm975, %v972, -inf
    %977 = vmax.xlane.f32.xlu0 %v976
    %v978 = vpop.xlane.xlu0 %977
    %v979 = vsub.f32 %v972, %v978
    %v980 = vmul.f32 %v979, 1.442695
    %v981 = vpow.pop %v980
    %v982 = vsel %vm975, %v981, 0.0
    %983 = vadd.xlane.f32.xlu0 %v982
    %v984 = vpop.xlane.xlu0 %983
    %v985 = vlog2.pop %v984
    %v986 = vmul.f32 %v985, 0.6931472
    %v987 = vadd.f32 %v978, %v986
    %v988 = vsub.f32 %v972, %v987
    %v989 = vsel %vm898, %v988, 0.0
    %v990 = vsel %vm975, %v989, 0.0
    %991 = vadd.xlane.f32.xlu0 %v990
    %v992 = vpop.xlane.xlu0 %991
    %v993 = vrot.slane %v992, 4
    %v994 = vadd.f32 %v992, %v993
    %v995 = vrot.slane %v994, 2
    %v996 = vadd.f32 %v994, %v995
    %v997 = vrot.slane %v996, 1
    %v998 = vadd.f32 %v996, %v997
    %s999 = vtos %v998
    %s1000 = sadd.f32 %s999, 0.0
    %v1001 = vsel %vm975, %v988, -inf
    %v1002 = vrot.slane %v1001, 4
    %v1003 = vmax.f32 %v1001, %v1002
    %v1004 = vrot.slane %v1003, 2
    %v1005 = vmax.f32 %v1003, %v1004
    %v1006 = vrot.slane %v1005, 1
    %v1007 = vmax.f32 %v1005, %v1006
    %v1008 = vsel %vm898, %v988, -1e+30
    %v1009 = vsel %vm975, %v1008, -inf
    %v1010 = vrot.slane %v1009, 4
    %v1011 = vmax.f32 %v1009, %v1010
    %v1012 = vrot.slane %v1011, 2
    %v1013 = vmax.f32 %v1011, %v1012
    %v1014 = vrot.slane %v1013, 1
    %v1015 = vmax.f32 %v1013, %v1014
    %vm1016 = vcmp.ge.f32.partialorder %v1015, %v1007
    %v1017 = vsel %vm1016, 1, 0
    %v1018 = vcvt.s32.f32 %v1017
    %vm1019 = vcmask 57344
    %v1020 = vsel %vm1019, %v1018, 0.0
    %1021 = vadd.xlane.f32.xlu0 %v1020
    %v1022 = vpop.xlane.xlu0 %1021
    %v1023 = vrot.slane %v1022, 4
    %v1024 = vadd.f32 %v1022, %v1023
    %v1025 = vrot.slane %v1024, 2
    %v1026 = vadd.f32 %v1024, %v1025
    %v1027 = vrot.slane %v1026, 1
    %v1028 = vadd.f32 %v1026, %v1027
    %s1029 = vtos %v1028
    %s1030 = sadd.f32 %s1029, 0.0
    %1031 = vrot.lane.b32.xlu0 %v891, 96
    %v1032 = vpop.permute.xlu0 %1031
    %v1034 = vsel %vm295, %v283, 0
    %v1036 = vsel %vm295, %v1032, 0
    %1038 = vmatprep.subr.mxu0 0.0
    %1039 = vmatpush1.xpose.msra.mxu0 0.0
    %1040 = vmatprep.subr.mxu0 0.0
    %1041 = vmatpush1.xpose.msra.mxu0 0.0
    %1042 = vmatprep.subr.mxu0 0.0
    %1043 = vmatpush1.xpose.msra.mxu0 0.0
    %1044 = vmatprep.subr.mxu0 0.0
    %1045 = vmatpush1.xpose.msra.mxu0 0.0
    %1046 = vmatprep.subr.mxu0 0.0
    %1047 = vmatpush1.xpose.msra.mxu0 0.0
    %1048 = vmatprep.subr.mxu0 0.0
    %1049 = vmatpush1.xpose.msra.mxu0 0.0
    %1050 = vmatprep.subr.mxu0 0.0
    %1051 = vmatpush1.xpose.msra.mxu0 0.0
    %1052 = vmatprep.subr.mxu0 0.0
    %1053 = vmatpush1.xpose.msra.mxu0 0.0
    %1054 = vmatprep.subr.mxu0 0.0
    %1055 = vmatpush1.xpose.msra.mxu0 0.0
    %1056 = vmatprep.subr.mxu0 0.0
    %1057 = vmatpush1.xpose.msra.mxu0 0.0
    %1058 = vmatprep.subr.mxu0 0.0
    %1059 = vmatpush1.xpose.msra.mxu0 0.0
    %1060 = vmatprep.subr.mxu0 0.0
    %1061 = vmatpush1.xpose.msra.mxu0 0.0
    %1062 = vmatprep.subr.mxu0 0.0
    %1063 = vmatpush1.xpose.msra.mxu0 0.0
    %1064 = vmatprep.subr.mxu0 0.0
    %1065 = vmatpush1.xpose.msra.mxu0 0.0
    %1066 = vmatprep.subr.mxu0 0.0
    %1067 = vmatpush1.xpose.msra.mxu0 0.0
    %1068 = vmatprep.subr.mxu0 0.0
    %1069 = vmatpush1.xpose.msra.mxu0 %v1036
    %1070 = vmatprep.subr.mxu0 0.0
    %1071 = vmatpush2.xpose.msra.mxu0 0.0
    %1072 = vmatprep.subr.mxu0 0.0
    %1073 = vmatpush2.xpose.msra.mxu0 0.0
    %1074 = vmatprep.subr.mxu0 0.0
    %1075 = vmatpush2.xpose.msra.mxu0 0.0
    %1076 = vmatprep.subr.mxu0 0.0
    %1077 = vmatpush2.xpose.msra.mxu0 0.0
    %1078 = vmatprep.subr.mxu0 0.0
    %1079 = vmatpush2.xpose.msra.mxu0 0.0
    %1080 = vmatprep.subr.mxu0 0.0
    %1081 = vmatpush2.xpose.msra.mxu0 0.0
    %1082 = vmatprep.subr.mxu0 0.0
    %1083 = vmatpush2.xpose.msra.mxu0 0.0
    %1084 = vmatprep.subr.mxu0 0.0
    %1085 = vmatpush2.xpose.msra.mxu0 0.0
    %1086 = vmatprep.subr.mxu0 0.0
    %1087 = vmatpush2.xpose.msra.mxu0 0.0
    %1088 = vmatprep.subr.mxu0 0.0
    %1089 = vmatpush2.xpose.msra.mxu0 0.0
    %1090 = vmatprep.subr.mxu0 0.0
    %1091 = vmatpush2.xpose.msra.mxu0 0.0
    %1092 = vmatprep.subr.mxu0 0.0
    %1093 = vmatpush2.xpose.msra.mxu0 0.0
    %1094 = vmatprep.subr.mxu0 0.0
    %1095 = vmatpush2.xpose.msra.mxu0 0.0
    %1096 = vmatprep.subr.mxu0 0.0
    %1097 = vmatpush2.xpose.msra.mxu0 0.0
    %1098 = vmatprep.subr.mxu0 0.0
    %1099 = vmatpush2.xpose.msra.mxu0 0.0
    %1100 = vmatprep.subr.mxu0 0.0
    %1101 = vmatpush2.xpose.msra.mxu0 0.0
    %1102 = vmatprep.mubr.f32.mxu0 0.0
    %1103 = vmatmul.mubr.f32.gmra.mxu0 %v1034
    %v1104 = vpop.f32.mrf.mxu0
    %v1105 = vadd.f32 0.0, %v1104
    %v1106 = vpop.f32.mrf.mxu0
    %1107 = vdwg.mxu0
    %v1108 = vsel %vm975, %v1105, -inf
    %1109 = vmax.xlane.f32.xlu0 %v1108
    %v1110 = vpop.xlane.xlu0 %1109
    %v1111 = vsub.f32 %v1105, %v1110
    %v1112 = vmul.f32 %v1111, 1.442695
    %v1113 = vpow.pop %v1112
    %v1114 = vsel %vm975, %v1113, 0.0
    %1115 = vadd.xlane.f32.xlu0 %v1114
    %v1116 = vpop.xlane.xlu0 %1115
    %v1117 = vlog2.pop %v1116
    %v1118 = vmul.f32 %v1117, 0.6931472
    %v1119 = vadd.f32 %v1110, %v1118
    %v1120 = vsub.f32 %v1105, %v1119
    %v1121 = vsel %vm898, %v1120, 0.0
    %v1122 = vsel %vm975, %v1121, 0.0
    %1123 = vadd.xlane.f32.xlu0 %v1122
    %v1124 = vpop.xlane.xlu0 %1123
    %v1125 = vrot.slane %v1124, 4
    %v1126 = vadd.f32 %v1124, %v1125
    %v1127 = vrot.slane %v1126, 2
    %v1128 = vadd.f32 %v1126, %v1127
    %v1129 = vrot.slane %v1128, 1
    %v1130 = vadd.f32 %v1128, %v1129
    %s1131 = vtos %v1130
    %s1132 = sadd.f32 %s1000, %s1131
    %v1133 = vsel %vm975, %v1120, -inf
    %v1134 = vrot.slane %v1133, 4
    %v1135 = vmax.f32 %v1133, %v1134
    %v1136 = vrot.slane %v1135, 2
    %v1137 = vmax.f32 %v1135, %v1136
    %v1138 = vrot.slane %v1137, 1
    %v1139 = vmax.f32 %v1137, %v1138
    %v1140 = vsel %vm898, %v1120, -1e+30
    %v1141 = vsel %vm975, %v1140, -inf
    %v1142 = vrot.slane %v1141, 4
    %v1143 = vmax.f32 %v1141, %v1142
    %v1144 = vrot.slane %v1143, 2
    %v1145 = vmax.f32 %v1143, %v1144
    %v1146 = vrot.slane %v1145, 1
    %v1147 = vmax.f32 %v1145, %v1146
    %vm1148 = vcmp.ge.f32.partialorder %v1147, %v1139
    %v1149 = vsel %vm1148, 1, 0
    %v1150 = vcvt.s32.f32 %v1149
    %v1151 = vsel %vm1019, %v1150, 0.0
    %1152 = vadd.xlane.f32.xlu0 %v1151
    %v1153 = vpop.xlane.xlu0 %1152
    %v1154 = vrot.slane %v1153, 4
    %v1155 = vadd.f32 %v1153, %v1154
    %v1156 = vrot.slane %v1155, 2
    %v1157 = vadd.f32 %v1155, %v1156
    %v1158 = vrot.slane %v1157, 1
    %v1159 = vadd.f32 %v1157, %v1158
    %s1160 = vtos %v1159
    %s1161 = sadd.f32 %s1030, %s1160
    %s1162 = ssub.f32 0.0, %s1132
    %v1163 = vrcp.pop 16.0
    %s1164 = vtos %v1163
    %s1165 = smul.f32 %s1162, %s1164
    %s1166 = scalar_lea.smem [#allocation13], 0
    %1167 = sst [smem:[%s1166]] %s1165
    %v1168 = vrcp.pop 16.0
    %s1169 = vtos %v1168
    %s1170 = smul.f32 %s1161, %s1169
    %s1171 = scalar_lea.smem [#allocation12], 0
    %1172 = sst [smem:[%s1171]] %s1170
    // Predicated region
    $region58: #{tpu_custom_call.1} parent=1 // pred_check
      _
    $region59: #{tpu_custom_call.1} parent=1 // pred_check_branch
      %1174 = sbr.rel (0) target = $region61
    $region60: #{tpu_custom_call.1} parent=1 // pred_region
      %s1176 = ssub.s32 16, 16
      %1177 = vsyncadd [#allocation5], %s1176
      %1180 = dma.smem_to_hbm [#allocation12], 16, %s9, [#allocation5]
    $region61: #{tpu_custom_call.1} parent=1 // pred_fallthru
      _
    // Predicated region
    $region62: #{tpu_custom_call.1} parent=1 // pred_check
      _
    $region63: #{tpu_custom_call.1} parent=1 // pred_check_branch
      %1182 = sbr.rel (0) target = $region65
    $region64: #{tpu_custom_call.1} parent=1 // pred_region
      %s1184 = ssub.s32 16, 16
      %1185 = vsyncadd [#allocation14], %s1184
      %1188 = dma.smem_to_hbm [#allocation13], 16, %s10, [#allocation14]
    $region65: #{tpu_custom_call.1} parent=1 // pred_fallthru
      _
    // Predicated region
    $region66: #{tpu_custom_call.1} parent=1 // pred_check
      _
    $region67: #{tpu_custom_call.1} parent=1 // pred_check_branch
      %1190 = sbr.rel (0) target = $region69
    $region68: #{tpu_custom_call.1} parent=1 // pred_region
      %s1192 = ssub.s32 128, 128
      %1193 = vsyncadd [#allocation4], %s1192
      %s1195 = sshll.u32 [#allocation15], 4
      %s1196 = int_to_ptr.vmem [resolvable:$true] %s1195
      %1198 = dma.vmem_to_hbm [thread:$0]  %s1196, 128, %s11, [#allocation4]
    $region69: #{tpu_custom_call.1} parent=1 // pred_fallthru
      _
    // Predicated region
    $region70: #{tpu_custom_call.1} parent=1 // pred_check
      _
    $region71: #{tpu_custom_call.1} parent=1 // pred_check_branch
      %1200 = sbr.rel (0) target = $region73
    $region72: #{tpu_custom_call.1} parent=1 // pred_region
      %1201 = dma.done [#allocation5], 16
    $region73: #{tpu_custom_call.1} parent=1 // pred_fallthru
      _
    // Predicated region
    $region74: #{tpu_custom_call.1} parent=1 // pred_check
      _
    $region75: #{tpu_custom_call.1} parent=1 // pred_check_branch
      %1203 = sbr.rel (0) target = $region77
    $region76: #{tpu_custom_call.1} parent=1 // pred_region
      %1204 = dma.done [#allocation14], 16
    $region77: #{tpu_custom_call.1} parent=1 // pred_fallthru
      _
    // Predicated region
    $region78: #{tpu_custom_call.1} parent=1 // pred_check
      _
    $region79: #{tpu_custom_call.1} parent=1 // pred_check_branch
      %1206 = sbr.rel (0) target = $region81
    $region80: #{tpu_custom_call.1} parent=1 // pred_region
      %1207 = dma.done [#allocation4], 128
    $region81: #{tpu_custom_call.1} parent=1 // pred_fallthru
      _
    %1208 = sfence
    %1209 = vsyncpa [#allocation3], 1
    %1210 = vsyncpa [#allocation7], 1
    %1211 = vsyncpa [#allocation10], 1
    %1212 = vsyncpa [#allocation4], 1
    %1213 = vsyncpa [#allocation5], 1
    %1214 = vsyncpa [#allocation14], 1

</llo_original>
